<compile_context>
chip_gen: v7x
topology: tpu7x:2x2x1
jax: 0.10.0
libtpu: 0.0.40
codegen_flags: <defaults>
</compile_context>

<pallas_src>
import numpy as np
import jax
import jax.numpy as jnp
from jax.experimental import pallas as pl
from jax.experimental.pallas import tpu as pltpu


_VMEM = pl.BlockSpec(memory_space=pltpu.MemorySpace.VMEM)
_LANE = 128   # lane width
_SUB = 8      # sublane width


def _round_up(n, m):
    return ((n + m - 1) // m) * m


def _pad2(x, r, c):
    return jnp.pad(x, ((0, r - x.shape[0]), (0, c - x.shape[1])))


# ----------------------------------------------------------------------------
# Fused forward math (used by the Pallas kernel body AND by the mirrored
# pure-JAX check, so kernel and check are guaranteed to be the same math).
# All array arguments are already padded / pre-transposed / cast.
# ----------------------------------------------------------------------------
def _fused_math(a_cd, a_dc, x_c, x_d, sel_c, sel_d,
                w_cd1, b_cd1, w_dc1, b_dc1,
                w_cd2, b_cd2, w_dc2, b_dc2,
                w_dec1, b_dec1, w_dec2, b_dec2):
    f32, bf16 = jnp.float32, jnp.bfloat16

    def conv(a, xs, xd, w, b, relu):
        # GraphConv branch: lin_rel(sum-aggregated src feats) + lin_root(x_dst) + b_rel
        # expressed as a single K = F_src_pad + F_dst_pad matmul.
        agg = jnp.dot(a, xs, preferred_element_type=f32)         # sum aggregation (MXU)
        inp = jnp.concatenate([agg.astype(bf16), xd], axis=-1)   # [agg | x_dst]
        out = jnp.dot(inp, w, preferred_element_type=f32) + b    # @ [W_rel ; W_root] + b
        return jnp.maximum(out, 0.0) if relu else out

    # ---- encoder layer 1 (+relu) ----
    h_d = conv(a_cd, x_c, x_d, w_cd1, b_cd1, True)    # drug dst   (cell -> drug)
    h_c = conv(a_dc, x_d, x_c, w_dc1, b_dc1, True)    # cell dst   (drug -> cell)
    h_db, h_cb = h_d.astype(bf16), h_c.astype(bf16)

    # ---- encoder layer 2 ----
    z_d = conv(a_cd, h_cb, h_db, w_cd2, b_cd2, False).astype(bf16)
    z_c = conv(a_dc, h_db, h_cb, w_dc2, b_dc2, False).astype(bf16)

    # ---- decoder: one-hot row gather on the MXU, Linear -> sigmoid -> Linear ----
    zc_g = jnp.dot(sel_c, z_c, preferred_element_type=f32)       # (E_pad, H_pad)
    zd_g = jnp.dot(sel_d, z_d, preferred_element_type=f32)
    zcat = jnp.concatenate([zc_g.astype(bf16), zd_g.astype(bf16)], axis=-1)
    h = jax.nn.sigmoid(jnp.dot(zcat, w_dec1, preferred_element_type=f32) + b_dec1)
    out = jnp.dot(h.astype(bf16), w_dec2, preferred_element_type=f32) + b_dec2
    return out   # (E_pad, 128) f32, real scalar prediction in column 0


def _fused_kernel(*refs):
    *in_refs, out_ref = refs
    out_ref[...] = _fused_math(*(r[...] for r in in_refs))


# ----------------------------------------------------------------------------
# Host-side preparation: padded bf16 operands, pre-transposed stacked weights,
# dense adjacency (built directly in the padded layout) and one-hot gather mats.
# ----------------------------------------------------------------------------
def _prepare(params, x_cell, x_drug, edge_index_cd, edge_label_index,
             n_cell, n_drug):
    f32, bf16 = jnp.float32, jnp.bfloat16
    hidden = params['b_rel_cd1'].shape[0]
    f_cell, f_drug = x_cell.shape[1], x_drug.shape[1]
    n_label = edge_label_index.shape[1]

    nc_p = _round_up(n_cell, _LANE)
    nd_p = _round_up(n_drug, _LANE)
    fc_p = _round_up(f_cell, _LANE)
    fd_p = _round_up(f_drug, _LANE)
    h_p = _round_up(hidden, _LANE)
    e_p = _round_up(n_label, _SUB)

    # Dense adjacency in the padded layout (unit weights; multi-edges add).
    # Padded rows/cols stay zero, so padding never leaks into real outputs.
    src_c, dst_d = edge_index_cd[0], edge_index_cd[1]
    a_cd = jnp.zeros((nd_p, nc_p), f32).at[dst_d, src_c].add(1.0)  # drug <- cellline
    a_dc = a_cd.T                                                  # cellline <- drug

    # One-hot selection matrices for the decoder gather (rows of edge_label_index).
    row1, row2 = edge_label_index[0], edge_label_index[1]
    e_ids = jnp.arange(n_label)
    sel_c = jnp.zeros((e_p, nc_p), f32).at[e_ids, row1].set(1.0)
    sel_d = jnp.zeros((e_p, nd_p), f32).at[e_ids, row2].set(1.0)

    def padW(w, r, c):   # torch (out, in) -> (in, out), zero-pad, bf16
        return _pad2(w.T, r, c).astype(bf16)

    def padB(b, c):
        return _pad2(b.reshape(1, -1), 1, c).astype(f32)

    # GraphConv weights stacked as [W_rel ; W_root] in (in, out) layout.
    w_cd1 = jnp.concatenate([padW(params['w_rel_cd1'], fc_p, h_p),
                             padW(params['w_root_cd1'], fd_p, h_p)], axis=0)
    w_dc1 = jnp.concatenate([padW(params['w_rel_dc1'], fd_p, h_p),
                             padW(params['w_root_dc1'], fc_p, h_p)], axis=0)
    w_cd2 = jnp.concatenate([padW(params['w_rel_cd2'], h_p, h_p),
                             padW(params['w_root_cd2'], h_p, h_p)], axis=0)
    w_dc2 = jnp.concatenate([padW(params['w_rel_dc2'], h_p, h_p),
                             padW(params['w_root_dc2'], h_p, h_p)], axis=0)

    # Decoder Linear(2H, H): split along the concat axis, stack in (in, out) layout.
    w1 = params['dec_w1']
    w_dec1 = jnp.concatenate([padW(w1[:, :hidden], h_p, h_p),
                              padW(w1[:, hidden:], h_p, h_p)], axis=0)
    # Decoder Linear(H, 1): pad the output to a lane-dense 128 (real result in col 0).
    w_dec2 = padW(params['dec_w2'], h_p, _LANE)
    b_dec2 = padB(params['dec_b2'], _LANE)

    ops = (a_cd.astype(bf16), a_dc.astype(bf16),
           _pad2(x_cell, nc_p, fc_p).astype(bf16),
           _pad2(x_drug, nd_p, fd_p).astype(bf16),
           sel_c.astype(bf16), sel_d.astype(bf16),
           w_cd1, padB(params['b_rel_cd1'], h_p),
           w_dc1, padB(params['b_rel_dc1'], h_p),
           w_cd2, padB(params['b_rel_cd2'], h_p),
           w_dc2, padB(params['b_rel_dc2'], h_p),
           w_dec1, padB(params['dec_b1'], h_p),
           w_dec2, b_dec2)
    return ops, e_p


# ----------------------------------------------------------------------------
# Full model forward: one fused Pallas kernel call.
# ----------------------------------------------------------------------------
def model_forward(params, x_cell, x_drug, edge_index_cd, edge_label_index,
                  n_cell, n_drug):
    ops, e_p = _prepare(params, x_cell, x_drug, edge_index_cd,
                        edge_label_index, n_cell, n_drug)
    n_label = edge_label_index.shape[1]
    out = pl.pallas_call(
        _fused_kernel,
        out_shape=jax.ShapeDtypeStruct((e_p, _LANE), jnp.float32),
        in_specs=[_VMEM] * len(ops),
        out_specs=_VMEM,
    )(*ops)
    return out[:n_label, 0]   # .view(-1) of the real (unpadded) predictions


# Mirrored pure-JAX check (identical padded bf16 math, no Pallas).
def model_forward_mirror(params, x_cell, x_drug, edge_index_cd,
                         edge_label_index, n_cell, n_drug):
    ops, _ = _prepare(params, x_cell, x_drug, edge_index_cd,
                      edge_label_index, n_cell, n_drug)
    n_label = edge_label_index.shape[1]
    return _fused_math(*ops)[:n_label, 0]


# Pure-f32 reference with the original (torch-semantics) math.
def model_forward_ref(params, x_cell, x_drug, edge_index_cd, edge_label_index,
                      n_cell, n_drug):
    src_c, dst_d = edge_index_cd[0], edge_index_cd[1]
    a_cd = jnp.zeros((n_drug, n_cell), jnp.float32).at[dst_d, src_c].add(1.0)
    a_dc = a_cd.T

    def gconv(a, xs, xd, wr, br, wo):
        return (a @ xs) @ wr.T + br + xd @ wo.T

    h_drug = jax.nn.relu(gconv(a_cd, x_cell, x_drug, params['w_rel_cd1'],
                               params['b_rel_cd1'], params['w_root_cd1']))
    h_cell = jax.nn.relu(gconv(a_dc, x_drug, x_cell, params['w_rel_dc1'],
                               params['b_rel_dc1'], params['w_root_dc1']))
    z_drug = gconv(a_cd, h_cell, h_drug, params['w_rel_cd2'],
                   params['b_rel_cd2'], params['w_root_cd2'])
    z_cell = gconv(a_dc, h_drug, h_cell, params['w_rel_dc2'],
                   params['b_rel_dc2'], params['w_root_dc2'])

    z = jnp.concatenate([z_cell[edge_label_index[0]],
                         z_drug[edge_label_index[1]]], axis=-1)
    h = jax.nn.sigmoid(z @ params['dec_w1'].T + params['dec_b1'])
    return (h @ params['dec_w2'].T + params['dec_b2']).reshape(-1)


# ----------------------------------------------------------------------------
# Deterministic parameter init (shapes implied by the module)
# ----------------------------------------------------------------------------
def init_params(key, f_cell, f_drug, hidden):
    ks = jax.random.split(key, 16)
    s = 0.1
    return {
        'w_rel_cd1':  s * jax.random.normal(ks[0], (hidden, f_cell), jnp.float32),
        'b_rel_cd1':  s * jax.random.normal(ks[1], (hidden,), jnp.float32),
        'w_root_cd1': s * jax.random.normal(ks[2], (hidden, f_drug), jnp.float32),
        'w_rel_dc1':  s * jax.random.normal(ks[3], (hidden, f_drug), jnp.float32),
        'b_rel_dc1':  s * jax.random.normal(ks[4], (hidden,), jnp.float32),
        'w_root_dc1': s * jax.random.normal(ks[5], (hidden, f_cell), jnp.float32),
        'w_rel_cd2':  s * jax.random.normal(ks[6], (hidden, hidden), jnp.float32),
        'b_rel_cd2':  s * jax.random.normal(ks[7], (hidden,), jnp.float32),
        'w_root_cd2': s * jax.random.normal(ks[8], (hidden, hidden), jnp.float32),
        'w_rel_dc2':  s * jax.random.normal(ks[9], (hidden, hidden), jnp.float32),
        'b_rel_dc2':  s * jax.random.normal(ks[10], (hidden,), jnp.float32),
        'w_root_dc2': s * jax.random.normal(ks[11], (hidden, hidden), jnp.float32),
        'dec_w1': s * jax.random.normal(ks[12], (hidden, 2 * hidden), jnp.float32),
        'dec_b1': s * jax.random.normal(ks[13], (hidden,), jnp.float32),
        'dec_w2': s * jax.random.normal(ks[14], (1, hidden), jnp.float32),
        'dec_b2': s * jax.random.normal(ks[15], (1,), jnp.float32),
    }


if __name__ == "__main__":
    key = jax.random.PRNGKey(0)
    k_param, k_xc, k_xd, k_e1, k_e2, k_l1, k_l2 = jax.random.split(key, 7)

    hidden = 32
    n_cell, n_drug = 8, 12
    f_cell, f_drug = 16, 20
    n_edges = 24        # graph edges (cellline -> drug); reverse added via A.T
    n_label = 16        # supervision edges (cellline idx, drug idx)

    params = init_params(k_param, f_cell, f_drug, hidden)

    x_cell = jax.random.normal(k_xc, (n_cell, f_cell), jnp.float32)
    x_drug = jax.random.normal(k_xd, (n_drug, f_drug), jnp.float32)

    edge_index_cd = jnp.stack([
        jax.random.randint(k_e1, (n_edges,), 0, n_cell),
        jax.random.randint(k_e2, (n_edges,), 0, n_drug),
    ], axis=0)
    edge_label_index = jnp.stack([
        jax.random.randint(k_l1, (n_label,), 0, n_cell),
        jax.random.randint(k_l2, (n_label,), 0, n_drug),
    ], axis=0)

    out = model_forward(params, x_cell, x_drug, edge_index_cd,
                        edge_label_index, n_cell, n_drug)
    out = jax.block_until_ready(out)
    assert out.shape == (n_label,)

    # 1) Kernel fidelity: identical padded-bf16 math in pure JAX.
    mirror = jax.block_until_ready(
        model_forward_mirror(params, x_cell, x_drug, edge_index_cd,
                             edge_label_index, n_cell, n_drug))
    np.testing.assert_allclose(np.asarray(out), np.asarray(mirror),
                               rtol=5e-3, atol=5e-3)

    # 2) Module semantics: full-f32 torch-style reference (bf16 MXU tolerance).
    ref = jax.block_until_ready(
        model_forward_ref(params, x_cell, x_drug, edge_index_cd,
                          edge_label_index, n_cell, n_drug))
    np.testing.assert_allclose(np.asarray(out), np.asarray(ref),
                               rtol=5e-2, atol=5e-2)

    print("KERNEL_OK")
</pallas_src>

<mosaic_0001>
module attributes {stable_mosaic.version = 11 : i64} {
  func.func @_fused_kernel(%arg0: memref<128x128xbf16, #tpu.memory_space<vmem>>, %arg1: memref<128x128xbf16, #tpu.memory_space<vmem>>, %arg2: memref<128x128xbf16, #tpu.memory_space<vmem>>, %arg3: memref<128x128xbf16, #tpu.memory_space<vmem>>, %arg4: memref<16x128xbf16, #tpu.memory_space<vmem>>, %arg5: memref<16x128xbf16, #tpu.memory_space<vmem>>, %arg6: memref<256x128xbf16, #tpu.memory_space<vmem>>, %arg7: memref<1x128xf32, #tpu.memory_space<vmem>>, %arg8: memref<256x128xbf16, #tpu.memory_space<vmem>>, %arg9: memref<1x128xf32, #tpu.memory_space<vmem>>, %arg10: memref<256x128xbf16, #tpu.memory_space<vmem>>, %arg11: memref<1x128xf32, #tpu.memory_space<vmem>>, %arg12: memref<256x128xbf16, #tpu.memory_space<vmem>>, %arg13: memref<1x128xf32, #tpu.memory_space<vmem>>, %arg14: memref<256x128xbf16, #tpu.memory_space<vmem>>, %arg15: memref<1x128xf32, #tpu.memory_space<vmem>>, %arg16: memref<128x128xbf16, #tpu.memory_space<vmem>>, %arg17: memref<1x128xf32, #tpu.memory_space<vmem>>, %arg18: memref<16x128xf32, #tpu.memory_space<vmem>>) attributes {dimension_semantics = [], scalar_prefetch = 0 : i64, scratch_operands = 0 : i64, tpu.core_type = #tpu.core_type<tc>} {
    %c0 = arith.constant 0 : index
    %c0_0 = arith.constant 0 : index
    %0 = vector.load %arg0[%c0, %c0_0] : memref<128x128xbf16, #tpu.memory_space<vmem>>, vector<128x128xbf16>
    %c0_1 = arith.constant 0 : index
    %c0_2 = arith.constant 0 : index
    %1 = vector.load %arg1[%c0_1, %c0_2] : memref<128x128xbf16, #tpu.memory_space<vmem>>, vector<128x128xbf16>
    %c0_3 = arith.constant 0 : index
    %c0_4 = arith.constant 0 : index
    %2 = vector.load %arg2[%c0_3, %c0_4] : memref<128x128xbf16, #tpu.memory_space<vmem>>, vector<128x128xbf16>
    %c0_5 = arith.constant 0 : index
    %c0_6 = arith.constant 0 : index
    %3 = vector.load %arg3[%c0_5, %c0_6] : memref<128x128xbf16, #tpu.memory_space<vmem>>, vector<128x128xbf16>
    %c0_7 = arith.constant 0 : index
    %c0_8 = arith.constant 0 : index
    %4 = vector.load %arg4[%c0_7, %c0_8] : memref<16x128xbf16, #tpu.memory_space<vmem>>, vector<16x128xbf16>
    %c0_9 = arith.constant 0 : index
    %c0_10 = arith.constant 0 : index
    %5 = vector.load %arg5[%c0_9, %c0_10] : memref<16x128xbf16, #tpu.memory_space<vmem>>, vector<16x128xbf16>
    %c0_11 = arith.constant 0 : index
    %c0_12 = arith.constant 0 : index
    %6 = vector.load %arg6[%c0_11, %c0_12] : memref<256x128xbf16, #tpu.memory_space<vmem>>, vector<256x128xbf16>
    %c0_13 = arith.constant 0 : index
    %c0_14 = arith.constant 0 : index
    %7 = vector.load %arg7[%c0_13, %c0_14] : memref<1x128xf32, #tpu.memory_space<vmem>>, vector<1x128xf32>
    %c0_15 = arith.constant 0 : index
    %c0_16 = arith.constant 0 : index
    %8 = vector.load %arg8[%c0_15, %c0_16] : memref<256x128xbf16, #tpu.memory_space<vmem>>, vector<256x128xbf16>
    %c0_17 = arith.constant 0 : index
    %c0_18 = arith.constant 0 : index
    %9 = vector.load %arg9[%c0_17, %c0_18] : memref<1x128xf32, #tpu.memory_space<vmem>>, vector<1x128xf32>
    %c0_19 = arith.constant 0 : index
    %c0_20 = arith.constant 0 : index
    %10 = vector.load %arg10[%c0_19, %c0_20] : memref<256x128xbf16, #tpu.memory_space<vmem>>, vector<256x128xbf16>
    %c0_21 = arith.constant 0 : index
    %c0_22 = arith.constant 0 : index
    %11 = vector.load %arg11[%c0_21, %c0_22] : memref<1x128xf32, #tpu.memory_space<vmem>>, vector<1x128xf32>
    %c0_23 = arith.constant 0 : index
    %c0_24 = arith.constant 0 : index
    %12 = vector.load %arg12[%c0_23, %c0_24] : memref<256x128xbf16, #tpu.memory_space<vmem>>, vector<256x128xbf16>
    %c0_25 = arith.constant 0 : index
    %c0_26 = arith.constant 0 : index
    %13 = vector.load %arg13[%c0_25, %c0_26] : memref<1x128xf32, #tpu.memory_space<vmem>>, vector<1x128xf32>
    %c0_27 = arith.constant 0 : index
    %c0_28 = arith.constant 0 : index
    %14 = vector.load %arg14[%c0_27, %c0_28] : memref<256x128xbf16, #tpu.memory_space<vmem>>, vector<256x128xbf16>
    %c0_29 = arith.constant 0 : index
    %c0_30 = arith.constant 0 : index
    %15 = vector.load %arg15[%c0_29, %c0_30] : memref<1x128xf32, #tpu.memory_space<vmem>>, vector<1x128xf32>
    %c0_31 = arith.constant 0 : index
    %c0_32 = arith.constant 0 : index
    %16 = vector.load %arg16[%c0_31, %c0_32] : memref<128x128xbf16, #tpu.memory_space<vmem>>, vector<128x128xbf16>
    %c0_33 = arith.constant 0 : index
    %c0_34 = arith.constant 0 : index
    %17 = vector.load %arg17[%c0_33, %c0_34] : memref<1x128xf32, #tpu.memory_space<vmem>>, vector<1x128xf32>
    %cst = arith.constant dense<0.000000e+00> : vector<128x128xf32>
    %18 = tpu.matmul %0, %2, %cst {dimension_numbers = #tpu.dot_dimension_numbers<[1], [0], [0], [1], [0, 0, 1, 1], [], []>} : vector<128x128xbf16>, vector<128x128xbf16>, vector<128x128xf32> -> vector<128x128xf32>
    %19 = arith.truncf %18 : vector<128x128xf32> to vector<128x128xbf16>
    %20 = tpu.concatenate %19, %3 in 1 : vector<128x128xbf16>, vector<128x128xbf16> -> vector<128x256xbf16>
    %cst_35 = arith.constant dense<0.000000e+00> : vector<128x128xf32>
    %21 = tpu.matmul %20, %6, %cst_35 {dimension_numbers = #tpu.dot_dimension_numbers<[1], [0], [0], [1], [0, 0, 1, 1], [], []>} : vector<128x256xbf16>, vector<256x128xbf16>, vector<128x128xf32> -> vector<128x128xf32>
    %22 = vector.broadcast %7 : vector<1x128xf32> to vector<128x128xf32>
    %23 = arith.addf %21, %22 : vector<128x128xf32>
    %cst_36 = arith.constant 0.000000e+00 : f32
    %24 = vector.broadcast %cst_36 : f32 to vector<128x128xf32>
    %25 = arith.maximumf %23, %24 : vector<128x128xf32>
    %cst_37 = arith.constant dense<0.000000e+00> : vector<128x128xf32>
    %26 = tpu.matmul %1, %3, %cst_37 {dimension_numbers = #tpu.dot_dimension_numbers<[1], [0], [0], [1], [0, 0, 1, 1], [], []>} : vector<128x128xbf16>, vector<128x128xbf16>, vector<128x128xf32> -> vector<128x128xf32>
    %27 = arith.truncf %26 : vector<128x128xf32> to vector<128x128xbf16>
    %28 = tpu.concatenate %27, %2 in 1 : vector<128x128xbf16>, vector<128x128xbf16> -> vector<128x256xbf16>
    %cst_38 = arith.constant dense<0.000000e+00> : vector<128x128xf32>
    %29 = tpu.matmul %28, %8, %cst_38 {dimension_numbers = #tpu.dot_dimension_numbers<[1], [0], [0], [1], [0, 0, 1, 1], [], []>} : vector<128x256xbf16>, vector<256x128xbf16>, vector<128x128xf32> -> vector<128x128xf32>
    %30 = vector.broadcast %9 : vector<1x128xf32> to vector<128x128xf32>
    %31 = arith.addf %29, %30 : vector<128x128xf32>
    %cst_39 = arith.constant 0.000000e+00 : f32
    %32 = vector.broadcast %cst_39 : f32 to vector<128x128xf32>
    %33 = arith.maximumf %31, %32 : vector<128x128xf32>
    %34 = arith.truncf %25 : vector<128x128xf32> to vector<128x128xbf16>
    %35 = arith.truncf %33 : vector<128x128xf32> to vector<128x128xbf16>
    %cst_40 = arith.constant dense<0.000000e+00> : vector<128x128xf32>
    %36 = tpu.matmul %0, %35, %cst_40 {dimension_numbers = #tpu.dot_dimension_numbers<[1], [0], [0], [1], [0, 0, 1, 1], [], []>} : vector<128x128xbf16>, vector<128x128xbf16>, vector<128x128xf32> -> vector<128x128xf32>
    %37 = arith.truncf %36 : vector<128x128xf32> to vector<128x128xbf16>
    %38 = tpu.concatenate %37, %34 in 1 : vector<128x128xbf16>, vector<128x128xbf16> -> vector<128x256xbf16>
    %cst_41 = arith.constant dense<0.000000e+00> : vector<128x128xf32>
    %39 = tpu.matmul %38, %10, %cst_41 {dimension_numbers = #tpu.dot_dimension_numbers<[1], [0], [0], [1], [0, 0, 1, 1], [], []>} : vector<128x256xbf16>, vector<256x128xbf16>, vector<128x128xf32> -> vector<128x128xf32>
    %40 = vector.broadcast %11 : vector<1x128xf32> to vector<128x128xf32>
    %41 = arith.addf %39, %40 : vector<128x128xf32>
    %42 = arith.truncf %41 : vector<128x128xf32> to vector<128x128xbf16>
    %cst_42 = arith.constant dense<0.000000e+00> : vector<128x128xf32>
    %43 = tpu.matmul %1, %34, %cst_42 {dimension_numbers = #tpu.dot_dimension_numbers<[1], [0], [0], [1], [0, 0, 1, 1], [], []>} : vector<128x128xbf16>, vector<128x128xbf16>, vector<128x128xf32> -> vector<128x128xf32>
    %44 = arith.truncf %43 : vector<128x128xf32> to vector<128x128xbf16>
    %45 = tpu.concatenate %44, %35 in 1 : vector<128x128xbf16>, vector<128x128xbf16> -> vector<128x256xbf16>
    %cst_43 = arith.constant dense<0.000000e+00> : vector<128x128xf32>
    %46 = tpu.matmul %45, %12, %cst_43 {dimension_numbers = #tpu.dot_dimension_numbers<[1], [0], [0], [1], [0, 0, 1, 1], [], []>} : vector<128x256xbf16>, vector<256x128xbf16>, vector<128x128xf32> -> vector<128x128xf32>
    %47 = vector.broadcast %13 : vector<1x128xf32> to vector<128x128xf32>
    %48 = arith.addf %46, %47 : vector<128x128xf32>
    %49 = arith.truncf %48 : vector<128x128xf32> to vector<128x128xbf16>
    %cst_44 = arith.constant dense<0.000000e+00> : vector<16x128xf32>
    %50 = tpu.matmul %4, %49, %cst_44 {dimension_numbers = #tpu.dot_dimension_numbers<[1], [0], [0], [1], [0, 0, 1, 1], [], []>} : vector<16x128xbf16>, vector<128x128xbf16>, vector<16x128xf32> -> vector<16x128xf32>
    %cst_45 = arith.constant dense<0.000000e+00> : vector<16x128xf32>
    %51 = tpu.matmul %5, %42, %cst_45 {dimension_numbers = #tpu.dot_dimension_numbers<[1], [0], [0], [1], [0, 0, 1, 1], [], []>} : vector<16x128xbf16>, vector<128x128xbf16>, vector<16x128xf32> -> vector<16x128xf32>
    %52 = arith.truncf %50 : vector<16x128xf32> to vector<16x128xbf16>
    %53 = arith.truncf %51 : vector<16x128xf32> to vector<16x128xbf16>
    %54 = tpu.concatenate %52, %53 in 1 : vector<16x128xbf16>, vector<16x128xbf16> -> vector<16x256xbf16>
    %cst_46 = arith.constant dense<0.000000e+00> : vector<16x128xf32>
    %55 = tpu.matmul %54, %14, %cst_46 {dimension_numbers = #tpu.dot_dimension_numbers<[1], [0], [0], [1], [0, 0, 1, 1], [], []>} : vector<16x256xbf16>, vector<256x128xbf16>, vector<16x128xf32> -> vector<16x128xf32>
    %56 = vector.broadcast %15 : vector<1x128xf32> to vector<16x128xf32>
    %57 = arith.addf %55, %56 : vector<16x128xf32>
    %58 = arith.negf %57 : vector<16x128xf32>
    %59 = math.exp %58 : vector<16x128xf32>
    %cst_47 = arith.constant 1.000000e+00 : f32
    %60 = vector.broadcast %cst_47 : f32 to vector<16x128xf32>
    %61 = arith.addf %60, %59 : vector<16x128xf32>
    %62 = arith.divf %60, %61 : vector<16x128xf32>
    %63 = arith.truncf %62 : vector<16x128xf32> to vector<16x128xbf16>
    %cst_48 = arith.constant dense<0.000000e+00> : vector<16x128xf32>
    %64 = tpu.matmul %63, %16, %cst_48 {dimension_numbers = #tpu.dot_dimension_numbers<[1], [0], [0], [1], [0, 0, 1, 1], [], []>} : vector<16x128xbf16>, vector<128x128xbf16>, vector<16x128xf32> -> vector<16x128xf32>
    %65 = vector.broadcast %17 : vector<1x128xf32> to vector<16x128xf32>
    %66 = arith.addf %64, %65 : vector<16x128xf32>
    %c0_49 = arith.constant 0 : index
    %c0_50 = arith.constant 0 : index
    %67 = vector.load %arg18[%c0_49, %c0_50] : memref<16x128xf32, #tpu.memory_space<vmem>>, vector<16x128xf32>
    tpu.vector_store %arg18[%c0_49, %c0_50], %66 {strides = array<i32>} : memref<16x128xf32, #tpu.memory_space<vmem>>, vector<16x128xf32>,
    return
  }
}

</mosaic_0001>

<llo_original>
// kernel: tpu_custom_call.1
$region0: #{tpu_custom_call.1}
  #allocation0 [shape = 'u32[]', space=smem, size = 0x4, offset = 0x4, fixed_abs, tag = 'smem constant byte address 0x4 - core index']
  #allocation1 [shape = 'u32[144,128]{1,0:T(1,128)}', space=vmem, size = 0x12000, scoped, tag = 'internal scratch']
  %s0 = inlined_call_operand.hbm [shape: bf16[128,128], index: 0, kind: input, shape index: {}]
  %s1 = inlined_call_operand.hbm [shape: bf16[128,128], index: 1, kind: input, shape index: {}]
  %s2 = inlined_call_operand.hbm [shape: bf16[128,128], index: 2, kind: input, shape index: {}]
  %s3 = inlined_call_operand.hbm [shape: bf16[128,128], index: 3, kind: input, shape index: {}]
  %s4 = inlined_call_operand.vmem [shape: bf16[16,128], index: 4, kind: input, shape index: {}]
  %s5 = inlined_call_operand.vmem [shape: bf16[16,128], index: 5, kind: input, shape index: {}]
  %s6 = inlined_call_operand.hbm [shape: bf16[256,128], index: 6, kind: input, shape index: {}]
  %s7 = inlined_call_operand.vmem [shape: f32[1,128], index: 7, kind: input, shape index: {}]
  %s8 = inlined_call_operand.hbm [shape: bf16[256,128], index: 8, kind: input, shape index: {}]
  %s9 = inlined_call_operand.vmem [shape: f32[1,128], index: 9, kind: input, shape index: {}]
  %s10 = inlined_call_operand.hbm [shape: bf16[256,128], index: 10, kind: input, shape index: {}]
  %s11 = inlined_call_operand.vmem [shape: f32[1,128], index: 11, kind: input, shape index: {}]
  %s12 = inlined_call_operand.hbm [shape: bf16[256,128], index: 12, kind: input, shape index: {}]
  %s13 = inlined_call_operand.vmem [shape: f32[1,128], index: 13, kind: input, shape index: {}]
  %s14 = inlined_call_operand.hbm [shape: bf16[256,128], index: 14, kind: input, shape index: {}]
  %s15 = inlined_call_operand.vmem [shape: f32[1,128], index: 15, kind: input, shape index: {}]
  %s16 = inlined_call_operand.hbm [shape: bf16[128,128], index: 16, kind: input, shape index: {}]
  %s17 = inlined_call_operand.vmem [shape: f32[1,128], index: 17, kind: input, shape index: {}]
  %s18 = inlined_call_operand.hbm [shape: f32[16,128], index: 18, kind: output, shape index: {}]
  %s19 = sld [smem:[#allocation0]]
  $region122: #{tpu_custom_call.1} parent=0
    _
  %s21 = ssub.s32 1, %s19
  %s22 = scalar_select 0, %s21, %s19
  $region1: #{tpu_custom_call.1} parent=0
    #allocation2 [shape = 'u8[32768]{0}', space=vmem, size = 0x8000, scoped, tag = 'input window, operand 0, single buffered']
    #allocation3 [shape = 's32[1]{0}', space=sflag, size = 0x4, scoped, tag = 'scoped memory for tpu_custom_call.1']
    #allocation4 [shape = 's32[1]{0}', space=sflag, size = 0x4, scoped, tag = 'scoped memory for tpu_custom_call.1']
    #allocation5 [shape = 'u8[32768]{0}', space=vmem, size = 0x8000, scoped, tag = 'input window, operand 1, single buffered']
    #allocation6 [shape = 's32[1]{0}', space=sflag, size = 0x4, scoped, tag = 'scoped memory for tpu_custom_call.1']
    #allocation7 [shape = 'u8[32768]{0}', space=vmem, size = 0x8000, scoped, tag = 'input window, operand 2, single buffered']
    #allocation8 [shape = 'u8[32768]{0}', space=vmem, size = 0x8000, scoped, tag = 'input window, operand 3, single buffered']
    #allocation9 [shape = 's32[1]{0}', space=sflag, size = 0x4, scoped, tag = 'scoped memory for tpu_custom_call.1']
    #allocation10 [shape = 'u8[65536]{0}', space=vmem, size = 0x10000, scoped, tag = 'input window, operand 6, single buffered']
    #allocation11 [shape = 'u8[65536]{0}', space=vmem, size = 0x10000, scoped, tag = 'input window, operand 8, single buffered']
    #allocation12 [shape = 's32[1]{0}', space=sflag, size = 0x4, scoped, tag = 'scoped memory for tpu_custom_call.1']
    #allocation13 [shape = 'u8[65536]{0}', space=vmem, size = 0x10000, scoped, tag = 'input window, operand 10, single buffered']
    #allocation14 [shape = 'u8[65536]{0}', space=vmem, size = 0x10000, scoped, tag = 'input window, operand 12, single buffered']
    #allocation15 [shape = 's32[1]{0}', space=sflag, size = 0x4, scoped, tag = 'scoped memory for tpu_custom_call.1']
    #allocation16 [shape = 'u8[65536]{0}', space=vmem, size = 0x10000, scoped, tag = 'input window, operand 14, single buffered']
    #allocation17 [shape = 'u8[32768]{0}', space=vmem, size = 0x8000, scoped, tag = 'input window, operand 16, single buffered']
    #allocation18 [shape = 's32[1]{0}', space=sflag, size = 0x4, scoped, tag = 'scoped memory for tpu_custom_call.1']
    #allocation19 [shape = 'u8[8192]{0}', space=vmem, size = 0x2000, scoped, tag = 'output window, operand 0, single buffered']
    %23 = vsyncpa [#allocation3], 0
    %24 = vsyncpa [#allocation6], 0
    %25 = vsyncpa [#allocation9], 0
    %26 = vsyncpa [#allocation12], 0
    %27 = vsyncpa [#allocation15], 0
    %28 = vsyncpa [#allocation18], 0
    %29 = vsyncpa [#allocation4], 0
    // Predicated region
    $region2: #{tpu_custom_call.1} parent=1 // pred_check
      _
    $region3: #{tpu_custom_call.1} parent=1 // pred_check_branch
      %31 = sbr.rel (0) target = $region5
    $region4: #{tpu_custom_call.1} parent=1 // pred_region
      %s33 = ssub.s32 1024, 1024
      %34 = vsyncadd [#allocation3], %s33
      %s35 = sshll.u32 [#allocation2], 4
      %s36 = int_to_ptr.vmem [resolvable:$true] %s35
      %41 = dma.hbm_to_vmem [thread:$0]  %s0, 1024, %s36, [#allocation3], 64, 64, 4
    $region5: #{tpu_custom_call.1} parent=1 // pred_fallthru
      _
    // Predicated region
    $region6: #{tpu_custom_call.1} parent=1 // pred_check
      _
    $region7: #{tpu_custom_call.1} parent=1 // pred_check_branch
      %43 = sbr.rel (0) target = $region9
    $region8: #{tpu_custom_call.1} parent=1 // pred_region
      %s45 = ssub.s32 1024, 1024
      %46 = vsyncadd [#allocation6], %s45
      %s47 = sshll.u32 [#allocation5], 4
      %s48 = int_to_ptr.vmem [resolvable:$true] %s47
      %53 = dma.hbm_to_vmem [thread:$0]  %s1, 1024, %s48, [#allocation6], 64, 64, 4
    $region9: #{tpu_custom_call.1} parent=1 // pred_fallthru
      _
    // Predicated region
    $region10: #{tpu_custom_call.1} parent=1 // pred_check
      _
    $region11: #{tpu_custom_call.1} parent=1 // pred_check_branch
      %55 = sbr.rel (0) target = $region13
    $region12: #{tpu_custom_call.1} parent=1 // pred_region
      %s57 = ssub.s32 1024, 1024
      %58 = vsyncadd [#allocation6], %s57
      %s59 = sshll.u32 [#allocation7], 4
      %s60 = int_to_ptr.vmem [resolvable:$true] %s59
      %65 = dma.hbm_to_vmem [thread:$0]  %s2, 1024, %s60, [#allocation6], 64, 64, 4
    $region13: #{tpu_custom_call.1} parent=1 // pred_fallthru
      _
    // Predicated region
    $region14: #{tpu_custom_call.1} parent=1 // pred_check
      _
    $region15: #{tpu_custom_call.1} parent=1 // pred_check_branch
      %67 = sbr.rel (0) target = $region17
    $region16: #{tpu_custom_call.1} parent=1 // pred_region
      %s69 = ssub.s32 1024, 1024
      %70 = vsyncadd [#allocation9], %s69
      %s71 = sshll.u32 [#allocation8], 4
      %s72 = int_to_ptr.vmem [resolvable:$true] %s71
      %77 = dma.hbm_to_vmem [thread:$0]  %s3, 1024, %s72, [#allocation9], 64, 64, 4
    $region17: #{tpu_custom_call.1} parent=1 // pred_fallthru
      _
    // Predicated region
    $region18: #{tpu_custom_call.1} parent=1 // pred_check
      _
    $region19: #{tpu_custom_call.1} parent=1 // pred_check_branch
      %79 = sbr.rel (0) target = $region21
    $region20: #{tpu_custom_call.1} parent=1 // pred_region
      _
    $region21: #{tpu_custom_call.1} parent=1 // pred_fallthru
      _
    // Predicated region
    $region22: #{tpu_custom_call.1} parent=1 // pred_check
      _
    $region23: #{tpu_custom_call.1} parent=1 // pred_check_branch
      %81 = sbr.rel (0) target = $region25
    $region24: #{tpu_custom_call.1} parent=1 // pred_region
      _
    $region25: #{tpu_custom_call.1} parent=1 // pred_fallthru
      _
    // Predicated region
    $region26: #{tpu_custom_call.1} parent=1 // pred_check
      _
    $region27: #{tpu_custom_call.1} parent=1 // pred_check_branch
      %83 = sbr.rel (0) target = $region29
    $region28: #{tpu_custom_call.1} parent=1 // pred_region
      %s85 = ssub.s32 2048, 2048
      %86 = vsyncadd [#allocation9], %s85
      %s87 = sshll.u32 [#allocation10], 4
      %s88 = int_to_ptr.vmem [resolvable:$true] %s87
      %93 = dma.hbm_to_vmem [thread:$0]  %s6, 2048, %s88, [#allocation9], 64, 64, 4
    $region29: #{tpu_custom_call.1} parent=1 // pred_fallthru
      _
    // Predicated region
    $region30: #{tpu_custom_call.1} parent=1 // pred_check
      _
    $region31: #{tpu_custom_call.1} parent=1 // pred_check_branch
      %95 = sbr.rel (0) target = $region33
    $region32: #{tpu_custom_call.1} parent=1 // pred_region
      _
    $region33: #{tpu_custom_call.1} parent=1 // pred_fallthru
      _
    // Predicated region
    $region34: #{tpu_custom_call.1} parent=1 // pred_check
      _
    $region35: #{tpu_custom_call.1} parent=1 // pred_check_branch
      %97 = sbr.rel (0) target = $region37
    $region36: #{tpu_custom_call.1} parent=1 // pred_region
      %s99 = ssub.s32 2048, 2048
      %100 = vsyncadd [#allocation12], %s99
      %s101 = sshll.u32 [#allocation11], 4
      %s102 = int_to_ptr.vmem [resolvable:$true] %s101
      %107 = dma.hbm_to_vmem [thread:$0]  %s8, 2048, %s102, [#allocation12], 64, 64, 4
    $region37: #{tpu_custom_call.1} parent=1 // pred_fallthru
      _
    // Predicated region
    $region38: #{tpu_custom_call.1} parent=1 // pred_check
      _
    $region39: #{tpu_custom_call.1} parent=1 // pred_check_branch
      %109 = sbr.rel (0) target = $region41
    $region40: #{tpu_custom_call.1} parent=1 // pred_region
      _
    $region41: #{tpu_custom_call.1} parent=1 // pred_fallthru
      _
    // Predicated region
    $region42: #{tpu_custom_call.1} parent=1 // pred_check
      _
    $region43: #{tpu_custom_call.1} parent=1 // pred_check_branch
      %111 = sbr.rel (0) target = $region45
    $region44: #{tpu_custom_call.1} parent=1 // pred_region
      %s113 = ssub.s32 2048, 2048
      %114 = vsyncadd [#allocation12], %s113
      %s115 = sshll.u32 [#allocation13], 4
      %s116 = int_to_ptr.vmem [resolvable:$true] %s115
      %121 = dma.hbm_to_vmem [thread:$0]  %s10, 2048, %s116, [#allocation12], 64, 64, 4
    $region45: #{tpu_custom_call.1} parent=1 // pred_fallthru
      _
    // Predicated region
    $region46: #{tpu_custom_call.1} parent=1 // pred_check
      _
    $region47: #{tpu_custom_call.1} parent=1 // pred_check_branch
      %123 = sbr.rel (0) target = $region49
    $region48: #{tpu_custom_call.1} parent=1 // pred_region
      _
    $region49: #{tpu_custom_call.1} parent=1 // pred_fallthru
      _
    // Predicated region
    $region50: #{tpu_custom_call.1} parent=1 // pred_check
      _
    $region51: #{tpu_custom_call.1} parent=1 // pred_check_branch
      %125 = sbr.rel (0) target = $region53
    $region52: #{tpu_custom_call.1} parent=1 // pred_region
      %s127 = ssub.s32 2048, 2048
      %128 = vsyncadd [#allocation15], %s127
      %s129 = sshll.u32 [#allocation14], 4
      %s130 = int_to_ptr.vmem [resolvable:$true] %s129
      %135 = dma.hbm_to_vmem [thread:$0]  %s12, 2048, %s130, [#allocation15], 64, 64, 4
    $region53: #{tpu_custom_call.1} parent=1 // pred_fallthru
      _
    // Predicated region
    $region54: #{tpu_custom_call.1} parent=1 // pred_check
      _
    $region55: #{tpu_custom_call.1} parent=1 // pred_check_branch
      %137 = sbr.rel (0) target = $region57
    $region56: #{tpu_custom_call.1} parent=1 // pred_region
      _
    $region57: #{tpu_custom_call.1} parent=1 // pred_fallthru
      _
    // Predicated region
    $region58: #{tpu_custom_call.1} parent=1 // pred_check
      _
    $region59: #{tpu_custom_call.1} parent=1 // pred_check_branch
      %139 = sbr.rel (0) target = $region61
    $region60: #{tpu_custom_call.1} parent=1 // pred_region
      %s141 = ssub.s32 2048, 2048
      %142 = vsyncadd [#allocation15], %s141
      %s143 = sshll.u32 [#allocation16], 4
      %s144 = int_to_ptr.vmem [resolvable:$true] %s143
      %149 = dma.hbm_to_vmem [thread:$0]  %s14, 2048, %s144, [#allocation15], 64, 64, 4
    $region61: #{tpu_custom_call.1} parent=1 // pred_fallthru
      _
    // Predicated region
    $region62: #{tpu_custom_call.1} parent=1 // pred_check
      _
    $region63: #{tpu_custom_call.1} parent=1 // pred_check_branch
      %151 = sbr.rel (0) target = $region65
    $region64: #{tpu_custom_call.1} parent=1 // pred_region
      _
    $region65: #{tpu_custom_call.1} parent=1 // pred_fallthru
      _
    // Predicated region
    $region66: #{tpu_custom_call.1} parent=1 // pred_check
      _
    $region67: #{tpu_custom_call.1} parent=1 // pred_check_branch
      %153 = sbr.rel (0) target = $region69
    $region68: #{tpu_custom_call.1} parent=1 // pred_region
      %s155 = ssub.s32 1024, 1024
      %156 = vsyncadd [#allocation18], %s155
      %s157 = sshll.u32 [#allocation17], 4
      %s158 = int_to_ptr.vmem [resolvable:$true] %s157
      %163 = dma.hbm_to_vmem [thread:$0]  %s16, 1024, %s158, [#allocation18], 64, 64, 4
    $region69: #{tpu_custom_call.1} parent=1 // pred_fallthru
      _
    // Predicated region
    $region70: #{tpu_custom_call.1} parent=1 // pred_check
      _
    $region71: #{tpu_custom_call.1} parent=1 // pred_check_branch
      %165 = sbr.rel (0) target = $region73
    $region72: #{tpu_custom_call.1} parent=1 // pred_region
      _
    $region73: #{tpu_custom_call.1} parent=1 // pred_fallthru
      _
    // Predicated region
    $region74: #{tpu_custom_call.1} parent=1 // pred_check
      _
    $region75: #{tpu_custom_call.1} parent=1 // pred_check_branch
      %167 = sbr.rel (0) target = $region77
    $region76: #{tpu_custom_call.1} parent=1 // pred_region
      %168 = dma.done [#allocation3], 1024
    $region77: #{tpu_custom_call.1} parent=1 // pred_fallthru
      _
    // Predicated region
    $region78: #{tpu_custom_call.1} parent=1 // pred_check
      _
    $region79: #{tpu_custom_call.1} parent=1 // pred_check_branch
      %170 = sbr.rel (0) target = $region81
    $region80: #{tpu_custom_call.1} parent=1 // pred_region
      %171 = dma.done [#allocation6], 1024
    $region81: #{tpu_custom_call.1} parent=1 // pred_fallthru
      _
    // Predicated region
    $region82: #{tpu_custom_call.1} parent=1 // pred_check
      _
    $region83: #{tpu_custom_call.1} parent=1 // pred_check_branch
      %173 = sbr.rel (0) target = $region85
    $region84: #{tpu_custom_call.1} parent=1 // pred_region
      %174 = dma.done [#allocation6], 1024
    $region85: #{tpu_custom_call.1} parent=1 // pred_fallthru
      _
    // Predicated region
    $region86: #{tpu_custom_call.1} parent=1 // pred_check
      _
    $region87: #{tpu_custom_call.1} parent=1 // pred_check_branch
      %176 = sbr.rel (0) target = $region89
    $region88: #{tpu_custom_call.1} parent=1 // pred_region
      %177 = dma.done [#allocation9], 1024
    $region89: #{tpu_custom_call.1} parent=1 // pred_fallthru
      _
    // Predicated region
    $region90: #{tpu_custom_call.1} parent=1 // pred_check
      _
    $region91: #{tpu_custom_call.1} parent=1 // pred_check_branch
      %179 = sbr.rel (0) target = $region93
    $region92: #{tpu_custom_call.1} parent=1 // pred_region
      %180 = dma.done [#allocation9], 2048
    $region93: #{tpu_custom_call.1} parent=1 // pred_fallthru
      _
    // Predicated region
    $region94: #{tpu_custom_call.1} parent=1 // pred_check
      _
    $region95: #{tpu_custom_call.1} parent=1 // pred_check_branch
      %182 = sbr.rel (0) target = $region97
    $region96: #{tpu_custom_call.1} parent=1 // pred_region
      %183 = dma.done [#allocation12], 2048
    $region97: #{tpu_custom_call.1} parent=1 // pred_fallthru
      _
    // Predicated region
    $region98: #{tpu_custom_call.1} parent=1 // pred_check
      _
    $region99: #{tpu_custom_call.1} parent=1 // pred_check_branch
      %185 = sbr.rel (0) target = $region101
    $region100: #{tpu_custom_call.1} parent=1 // pred_region
      %186 = dma.done [#allocation12], 2048
    $region101: #{tpu_custom_call.1} parent=1 // pred_fallthru
      _
    // Predicated region
    $region102: #{tpu_custom_call.1} parent=1 // pred_check
      _
    $region103: #{tpu_custom_call.1} parent=1 // pred_check_branch
      %188 = sbr.rel (0) target = $region105
    $region104: #{tpu_custom_call.1} parent=1 // pred_region
      %189 = dma.done [#allocation15], 2048
    $region105: #{tpu_custom_call.1} parent=1 // pred_fallthru
      _
    // Predicated region
    $region106: #{tpu_custom_call.1} parent=1 // pred_check
      _
    $region107: #{tpu_custom_call.1} parent=1 // pred_check_branch
      %191 = sbr.rel (0) target = $region109
    $region108: #{tpu_custom_call.1} parent=1 // pred_region
      %192 = dma.done [#allocation15], 2048
    $region109: #{tpu_custom_call.1} parent=1 // pred_fallthru
      _
    // Predicated region
    $region110: #{tpu_custom_call.1} parent=1 // pred_check
      _
    $region111: #{tpu_custom_call.1} parent=1 // pred_check_branch
      %194 = sbr.rel (0) target = $region113
    $region112: #{tpu_custom_call.1} parent=1 // pred_region
      %195 = dma.done [#allocation18], 1024
    $region113: #{tpu_custom_call.1} parent=1 // pred_fallthru
      _
    %v197 = vld [vmem:[#allocation2] sm:$0xf]
    %v198 = vld [vmem:[#allocation2 + $0x4] sm:$0xf]
    %v199 = vld [vmem:[#allocation2 + $0x8] sm:$0xf]
    %v200 = vld [vmem:[#allocation2 + $0xc] sm:$0xf]
    %v201 = vld [vmem:[#allocation2 + $0x10] sm:$0xf]
    %v202 = vld [vmem:[#allocation2 + $0x14] sm:$0xf]
    %v203 = vld [vmem:[#allocation2 + $0x18] sm:$0xf]
    %v204 = vld [vmem:[#allocation2 + $0x1c] sm:$0xf]
    %v205 = vld [vmem:[#allocation2 + $0x20] sm:$0xf]
    %v206 = vld [vmem:[#allocation2 + $0x24] sm:$0xf]
    %v207 = vld [vmem:[#allocation2 + $0x28] sm:$0xf]
    %v208 = vld [vmem:[#allocation2 + $0x2c] sm:$0xf]
    %v209 = vld [vmem:[#allocation2 + $0x30] sm:$0xf]
    %v210 = vld [vmem:[#allocation2 + $0x34] sm:$0xf]
    %v211 = vld [vmem:[#allocation2 + $0x38] sm:$0xf]
    %v212 = vld [vmem:[#allocation2 + $0x3c] sm:$0xf]
    %v213 = vld [vmem:[#allocation5] sm:$0xf]
    %v214 = vld [vmem:[#allocation5 + $0x4] sm:$0xf]
    %v215 = vld [vmem:[#allocation5 + $0x8] sm:$0xf]
    %v216 = vld [vmem:[#allocation5 + $0xc] sm:$0xf]
    %v217 = vld [vmem:[#allocation5 + $0x10] sm:$0xf]
    %v218 = vld [vmem:[#allocation5 + $0x14] sm:$0xf]
    %v219 = vld [vmem:[#allocation5 + $0x18] sm:$0xf]
    %v220 = vld [vmem:[#allocation5 + $0x1c] sm:$0xf]
    %v221 = vld [vmem:[#allocation5 + $0x20] sm:$0xf]
    %v222 = vld [vmem:[#allocation5 + $0x24] sm:$0xf]
    %v223 = vld [vmem:[#allocation5 + $0x28] sm:$0xf]
    %v224 = vld [vmem:[#allocation5 + $0x2c] sm:$0xf]
    %v225 = vld [vmem:[#allocation5 + $0x30] sm:$0xf]
    %v226 = vld [vmem:[#allocation5 + $0x34] sm:$0xf]
    %v227 = vld [vmem:[#allocation5 + $0x38] sm:$0xf]
    %v228 = vld [vmem:[#allocation5 + $0x3c] sm:$0xf]
    %v229 = vld [vmem:[#allocation7] sm:$0xf]
    %v230 = vld [vmem:[#allocation7 + $0x4] sm:$0xf]
    %v231 = vld [vmem:[#allocation7 + $0x8] sm:$0xf]
    %v232 = vld [vmem:[#allocation7 + $0xc] sm:$0xf]
    %v233 = vld [vmem:[#allocation7 + $0x10] sm:$0xf]
    %v234 = vld [vmem:[#allocation7 + $0x14] sm:$0xf]
    %v235 = vld [vmem:[#allocation7 + $0x18] sm:$0xf]
    %v236 = vld [vmem:[#allocation7 + $0x1c] sm:$0xf]
    %v237 = vld [vmem:[#allocation7 + $0x20] sm:$0xf]
    %v238 = vld [vmem:[#allocation7 + $0x24] sm:$0xf]
    %v239 = vld [vmem:[#allocation7 + $0x28] sm:$0xf]
    %v240 = vld [vmem:[#allocation7 + $0x2c] sm:$0xf]
    %v241 = vld [vmem:[#allocation7 + $0x30] sm:$0xf]
    %v242 = vld [vmem:[#allocation7 + $0x34] sm:$0xf]
    %v243 = vld [vmem:[#allocation7 + $0x38] sm:$0xf]
    %v244 = vld [vmem:[#allocation7 + $0x3c] sm:$0xf]
    %v245 = vld [vmem:[#allocation8] sm:$0xf]
    %v246 = vld [vmem:[#allocation8 + $0x4] sm:$0xf]
    %v247 = vld [vmem:[#allocation8 + $0x8] sm:$0xf]
    %v248 = vld [vmem:[#allocation8 + $0xc] sm:$0xf]
    %v249 = vld [vmem:[#allocation8 + $0x10] sm:$0xf]
    %v250 = vld [vmem:[#allocation8 + $0x14] sm:$0xf]
    %v251 = vld [vmem:[#allocation8 + $0x18] sm:$0xf]
    %v252 = vld [vmem:[#allocation8 + $0x1c] sm:$0xf]
    %v253 = vld [vmem:[#allocation8 + $0x20] sm:$0xf]
    %v254 = vld [vmem:[#allocation8 + $0x24] sm:$0xf]
    %v255 = vld [vmem:[#allocation8 + $0x28] sm:$0xf]
    %v256 = vld [vmem:[#allocation8 + $0x2c] sm:$0xf]
    %v257 = vld [vmem:[#allocation8 + $0x30] sm:$0xf]
    %v258 = vld [vmem:[#allocation8 + $0x34] sm:$0xf]
    %v259 = vld [vmem:[#allocation8 + $0x38] sm:$0xf]
    %v260 = vld [vmem:[#allocation8 + $0x3c] sm:$0xf]
    %v261 = vld [vmem:[%s4] sm:$0xf]
    %v262 = vld [vmem:[%s4 + $0x4] sm:$0xf]
    %v263 = vld [vmem:[%s5] sm:$0xf]
    %v264 = vld [vmem:[%s5 + $0x4] sm:$0xf]
    %v265 = vld [vmem:[#allocation10] sm:$0xf]
    %v266 = vld [vmem:[#allocation10 + $0x4] sm:$0xf]
    %v267 = vld [vmem:[#allocation10 + $0x8] sm:$0xf]
    %v268 = vld [vmem:[#allocation10 + $0xc] sm:$0xf]
    %v269 = vld [vmem:[#allocation10 + $0x10] sm:$0xf]
    %v270 = vld [vmem:[#allocation10 + $0x14] sm:$0xf]
    %v271 = vld [vmem:[#allocation10 + $0x18] sm:$0xf]
    %v272 = vld [vmem:[#allocation10 + $0x1c] sm:$0xf]
    %v273 = vld [vmem:[#allocation10 + $0x20] sm:$0xf]
    %v274 = vld [vmem:[#allocation10 + $0x24] sm:$0xf]
    %v275 = vld [vmem:[#allocation10 + $0x28] sm:$0xf]
    %v276 = vld [vmem:[#allocation10 + $0x2c] sm:$0xf]
    %v277 = vld [vmem:[#allocation10 + $0x30] sm:$0xf]
    %v278 = vld [vmem:[#allocation10 + $0x34] sm:$0xf]
    %v279 = vld [vmem:[#allocation10 + $0x38] sm:$0xf]
    %v280 = vld [vmem:[#allocation10 + $0x3c] sm:$0xf]
    %v281 = vld [vmem:[#allocation10 + $0x40] sm:$0xf]
    %v282 = vld [vmem:[#allocation10 + $0x44] sm:$0xf]
    %v283 = vld [vmem:[#allocation10 + $0x48] sm:$0xf]
    %v284 = vld [vmem:[#allocation10 + $0x4c] sm:$0xf]
    %v285 = vld [vmem:[#allocation10 + $0x50] sm:$0xf]
    %v286 = vld [vmem:[#allocation10 + $0x54] sm:$0xf]
    %v287 = vld [vmem:[#allocation10 + $0x58] sm:$0xf]
    %v288 = vld [vmem:[#allocation10 + $0x5c] sm:$0xf]
    %v289 = vld [vmem:[#allocation10 + $0x60] sm:$0xf]
    %v290 = vld [vmem:[#allocation10 + $0x64] sm:$0xf]
    %v291 = vld [vmem:[#allocation10 + $0x68] sm:$0xf]
    %v292 = vld [vmem:[#allocation10 + $0x6c] sm:$0xf]
    %v293 = vld [vmem:[#allocation10 + $0x70] sm:$0xf]
    %v294 = vld [vmem:[#allocation10 + $0x74] sm:$0xf]
    %v295 = vld [vmem:[#allocation10 + $0x78] sm:$0xf]
    %v296 = vld [vmem:[#allocation10 + $0x7c] sm:$0xf]
    %v297 = vld [vmem:[%s7] sm:$0x1]
    %v298 = vld [vmem:[#allocation11] sm:$0xf]
    %v299 = vld [vmem:[#allocation11 + $0x4] sm:$0xf]
    %v300 = vld [vmem:[#allocation11 + $0x8] sm:$0xf]
    %v301 = vld [vmem:[#allocation11 + $0xc] sm:$0xf]
    %v302 = vld [vmem:[#allocation11 + $0x10] sm:$0xf]
    %v303 = vld [vmem:[#allocation11 + $0x14] sm:$0xf]
    %v304 = vld [vmem:[#allocation11 + $0x18] sm:$0xf]
    %v305 = vld [vmem:[#allocation11 + $0x1c] sm:$0xf]
    %v306 = vld [vmem:[#allocation11 + $0x20] sm:$0xf]
    %v307 = vld [vmem:[#allocation11 + $0x24] sm:$0xf]
    %v308 = vld [vmem:[#allocation11 + $0x28] sm:$0xf]
    %v309 = vld [vmem:[#allocation11 + $0x2c] sm:$0xf]
    %v310 = vld [vmem:[#allocation11 + $0x30] sm:$0xf]
    %v311 = vld [vmem:[#allocation11 + $0x34] sm:$0xf]
    %v312 = vld [vmem:[#allocation11 + $0x38] sm:$0xf]
    %v313 = vld [vmem:[#allocation11 + $0x3c] sm:$0xf]
    %v314 = vld [vmem:[#allocation11 + $0x40] sm:$0xf]
    %v315 = vld [vmem:[#allocation11 + $0x44] sm:$0xf]
    %v316 = vld [vmem:[#allocation11 + $0x48] sm:$0xf]
    %v317 = vld [vmem:[#allocation11 + $0x4c] sm:$0xf]
    %v318 = vld [vmem:[#allocation11 + $0x50] sm:$0xf]
    %v319 = vld [vmem:[#allocation11 + $0x54] sm:$0xf]
    %v320 = vld [vmem:[#allocation11 + $0x58] sm:$0xf]
    %v321 = vld [vmem:[#allocation11 + $0x5c] sm:$0xf]
    %v322 = vld [vmem:[#allocation11 + $0x60] sm:$0xf]
    %v323 = vld [vmem:[#allocation11 + $0x64] sm:$0xf]
    %v324 = vld [vmem:[#allocation11 + $0x68] sm:$0xf]
    %v325 = vld [vmem:[#allocation11 + $0x6c] sm:$0xf]
    %v326 = vld [vmem:[#allocation11 + $0x70] sm:$0xf]
    %v327 = vld [vmem:[#allocation11 + $0x74] sm:$0xf]
    %v328 = vld [vmem:[#allocation11 + $0x78] sm:$0xf]
    %v329 = vld [vmem:[#allocation11 + $0x7c] sm:$0xf]
    %v330 = vld [vmem:[%s9] sm:$0x1]
    %v331 = vld [vmem:[#allocation13] sm:$0xf]
    %v332 = vld [vmem:[#allocation13 + $0x4] sm:$0xf]
    %v333 = vld [vmem:[#allocation13 + $0x8] sm:$0xf]
    %v334 = vld [vmem:[#allocation13 + $0xc] sm:$0xf]
    %v335 = vld [vmem:[#allocation13 + $0x10] sm:$0xf]
    %v336 = vld [vmem:[#allocation13 + $0x14] sm:$0xf]
    %v337 = vld [vmem:[#allocation13 + $0x18] sm:$0xf]
    %v338 = vld [vmem:[#allocation13 + $0x1c] sm:$0xf]
    %v339 = vld [vmem:[#allocation13 + $0x20] sm:$0xf]
    %v340 = vld [vmem:[#allocation13 + $0x24] sm:$0xf]
    %v341 = vld [vmem:[#allocation13 + $0x28] sm:$0xf]
    %v342 = vld [vmem:[#allocation13 + $0x2c] sm:$0xf]
    %v343 = vld [vmem:[#allocation13 + $0x30] sm:$0xf]
    %v344 = vld [vmem:[#allocation13 + $0x34] sm:$0xf]
    %v345 = vld [vmem:[#allocation13 + $0x38] sm:$0xf]
    %v346 = vld [vmem:[#allocation13 + $0x3c] sm:$0xf]
    %v347 = vld [vmem:[#allocation13 + $0x40] sm:$0xf]
    %v348 = vld [vmem:[#allocation13 + $0x44] sm:$0xf]
    %v349 = vld [vmem:[#allocation13 + $0x48] sm:$0xf]
    %v350 = vld [vmem:[#allocation13 + $0x4c] sm:$0xf]
    %v351 = vld [vmem:[#allocation13 + $0x50] sm:$0xf]
    %v352 = vld [vmem:[#allocation13 + $0x54] sm:$0xf]
    %v353 = vld [vmem:[#allocation13 + $0x58] sm:$0xf]
    %v354 = vld [vmem:[#allocation13 + $0x5c] sm:$0xf]
    %v355 = vld [vmem:[#allocation13 + $0x60] sm:$0xf]
    %v356 = vld [vmem:[#allocation13 + $0x64] sm:$0xf]
    %v357 = vld [vmem:[#allocation13 + $0x68] sm:$0xf]
    %v358 = vld [vmem:[#allocation13 + $0x6c] sm:$0xf]
    %v359 = vld [vmem:[#allocation13 + $0x70] sm:$0xf]
    %v360 = vld [vmem:[#allocation13 + $0x74] sm:$0xf]
    %v361 = vld [vmem:[#allocation13 + $0x78] sm:$0xf]
    %v362 = vld [vmem:[#allocation13 + $0x7c] sm:$0xf]
    %v363 = vld [vmem:[%s11] sm:$0x1]
    %v364 = vld [vmem:[#allocation14] sm:$0xf]
    %v365 = vld [vmem:[#allocation14 + $0x4] sm:$0xf]
    %v366 = vld [vmem:[#allocation14 + $0x8] sm:$0xf]
    %v367 = vld [vmem:[#allocation14 + $0xc] sm:$0xf]
    %v368 = vld [vmem:[#allocation14 + $0x10] sm:$0xf]
    %v369 = vld [vmem:[#allocation14 + $0x14] sm:$0xf]
    %v370 = vld [vmem:[#allocation14 + $0x18] sm:$0xf]
    %v371 = vld [vmem:[#allocation14 + $0x1c] sm:$0xf]
    %v372 = vld [vmem:[#allocation14 + $0x20] sm:$0xf]
    %v373 = vld [vmem:[#allocation14 + $0x24] sm:$0xf]
    %v374 = vld [vmem:[#allocation14 + $0x28] sm:$0xf]
    %v375 = vld [vmem:[#allocation14 + $0x2c] sm:$0xf]
    %v376 = vld [vmem:[#allocation14 + $0x30] sm:$0xf]
    %v377 = vld [vmem:[#allocation14 + $0x34] sm:$0xf]
    %v378 = vld [vmem:[#allocation14 + $0x38] sm:$0xf]
    %v379 = vld [vmem:[#allocation14 + $0x3c] sm:$0xf]
    %v380 = vld [vmem:[#allocation14 + $0x40] sm:$0xf]
    %v381 = vld [vmem:[#allocation14 + $0x44] sm:$0xf]
    %v382 = vld [vmem:[#allocation14 + $0x48] sm:$0xf]
    %v383 = vld [vmem:[#allocation14 + $0x4c] sm:$0xf]
    %v384 = vld [vmem:[#allocation14 + $0x50] sm:$0xf]
    %v385 = vld [vmem:[#allocation14 + $0x54] sm:$0xf]
    %v386 = vld [vmem:[#allocation14 + $0x58] sm:$0xf]
    %v387 = vld [vmem:[#allocation14 + $0x5c] sm:$0xf]
    %v388 = vld [vmem:[#allocation14 + $0x60] sm:$0xf]
    %v389 = vld [vmem:[#allocation14 + $0x64] sm:$0xf]
    %v390 = vld [vmem:[#allocation14 + $0x68] sm:$0xf]
    %v391 = vld [vmem:[#allocation14 + $0x6c] sm:$0xf]
    %v392 = vld [vmem:[#allocation14 + $0x70] sm:$0xf]
    %v393 = vld [vmem:[#allocation14 + $0x74] sm:$0xf]
    %v394 = vld [vmem:[#allocation14 + $0x78] sm:$0xf]
    %v395 = vld [vmem:[#allocation14 + $0x7c] sm:$0xf]
    %v396 = vld [vmem:[%s13] sm:$0x1]
    %v397 = vld [vmem:[#allocation16] sm:$0xf]
    %v398 = vld [vmem:[#allocation16 + $0x4] sm:$0xf]
    %v399 = vld [vmem:[#allocation16 + $0x8] sm:$0xf]
    %v400 = vld [vmem:[#allocation16 + $0xc] sm:$0xf]
    %v401 = vld [vmem:[#allocation16 + $0x10] sm:$0xf]
    %v402 = vld [vmem:[#allocation16 + $0x14] sm:$0xf]
    %v403 = vld [vmem:[#allocation16 + $0x18] sm:$0xf]
    %v404 = vld [vmem:[#allocation16 + $0x1c] sm:$0xf]
    %v405 = vld [vmem:[#allocation16 + $0x20] sm:$0xf]
    %v406 = vld [vmem:[#allocation16 + $0x24] sm:$0xf]
    %v407 = vld [vmem:[#allocation16 + $0x28] sm:$0xf]
    %v408 = vld [vmem:[#allocation16 + $0x2c] sm:$0xf]
    %v409 = vld [vmem:[#allocation16 + $0x30] sm:$0xf]
    %v410 = vld [vmem:[#allocation16 + $0x34] sm:$0xf]
    %v411 = vld [vmem:[#allocation16 + $0x38] sm:$0xf]
    %v412 = vld [vmem:[#allocation16 + $0x3c] sm:$0xf]
    %v413 = vld [vmem:[#allocation16 + $0x40] sm:$0xf]
    %v414 = vld [vmem:[#allocation16 + $0x44] sm:$0xf]
    %v415 = vld [vmem:[#allocation16 + $0x48] sm:$0xf]
    %v416 = vld [vmem:[#allocation16 + $0x4c] sm:$0xf]
    %v417 = vld [vmem:[#allocation16 + $0x50] sm:$0xf]
    %v418 = vld [vmem:[#allocation16 + $0x54] sm:$0xf]
    %v419 = vld [vmem:[#allocation16 + $0x58] sm:$0xf]
    %v420 = vld [vmem:[#allocation16 + $0x5c] sm:$0xf]
    %v421 = vld [vmem:[#allocation16 + $0x60] sm:$0xf]
    %v422 = vld [vmem:[#allocation16 + $0x64] sm:$0xf]
    %v423 = vld [vmem:[#allocation16 + $0x68] sm:$0xf]
    %v424 = vld [vmem:[#allocation16 + $0x6c] sm:$0xf]
    %v425 = vld [vmem:[#allocation16 + $0x70] sm:$0xf]
    %v426 = vld [vmem:[#allocation16 + $0x74] sm:$0xf]
    %v427 = vld [vmem:[#allocation16 + $0x78] sm:$0xf]
    %v428 = vld [vmem:[#allocation16 + $0x7c] sm:$0xf]
    %v429 = vld [vmem:[%s15] sm:$0x1]
    %v430 = vld [vmem:[#allocation17] sm:$0xf]
    %v431 = vld [vmem:[#allocation17 + $0x4] sm:$0xf]
    %v432 = vld [vmem:[#allocation17 + $0x8] sm:$0xf]
    %v433 = vld [vmem:[#allocation17 + $0xc] sm:$0xf]
    %v434 = vld [vmem:[#allocation17 + $0x10] sm:$0xf]
    %v435 = vld [vmem:[#allocation17 + $0x14] sm:$0xf]
    %v436 = vld [vmem:[#allocation17 + $0x18] sm:$0xf]
    %v437 = vld [vmem:[#allocation17 + $0x1c] sm:$0xf]
    %v438 = vld [vmem:[#allocation17 + $0x20] sm:$0xf]
    %v439 = vld [vmem:[#allocation17 + $0x24] sm:$0xf]
    %v440 = vld [vmem:[#allocation17 + $0x28] sm:$0xf]
    %v441 = vld [vmem:[#allocation17 + $0x2c] sm:$0xf]
    %v442 = vld [vmem:[#allocation17 + $0x30] sm:$0xf]
    %v443 = vld [vmem:[#allocation17 + $0x34] sm:$0xf]
    %v444 = vld [vmem:[#allocation17 + $0x38] sm:$0xf]
    %v445 = vld [vmem:[#allocation17 + $0x3c] sm:$0xf]
    %v446 = vld [vmem:[%s17] sm:$0x1]
    %v463 = vunpack.c.l.b16 %v197
    %v464 = vunpack.c.l.b16 %v198
    %v465 = vunpack.c.l.b16 %v199
    %v466 = vunpack.c.l.b16 %v200
    %v467 = vunpack.c.l.b16 %v201
    %v468 = vunpack.c.l.b16 %v202
    %v469 = vunpack.c.l.b16 %v203
    %v470 = vunpack.c.l.b16 %v204
    %v471 = vunpack.c.l.b16 %v205
    %v472 = vunpack.c.l.b16 %v206
    %v473 = vunpack.c.l.b16 %v207
    %v474 = vunpack.c.l.b16 %v208
    %v475 = vunpack.c.l.b16 %v209
    %v476 = vunpack.c.l.b16 %v210
    %v477 = vunpack.c.l.b16 %v211
    %v478 = vunpack.c.l.b16 %v212
    %v479 = vpack.c.b16 %v464, %v463
    %v480 = vpack.c.b16 %v466, %v465
    %v481 = vpack.c.b16 %v468, %v467
    %v482 = vpack.c.b16 %v470, %v469
    %v483 = vpack.c.b16 %v472, %v471
    %v484 = vpack.c.b16 %v474, %v473
    %v485 = vpack.c.b16 %v476, %v475
    %v486 = vpack.c.b16 %v478, %v477
    %v511 = vunpack.c.l.b16 %v229
    %v512 = vunpack.c.l.b16 %v230
    %v513 = vunpack.c.l.b16 %v231
    %v514 = vunpack.c.l.b16 %v232
    %v515 = vunpack.c.l.b16 %v233
    %v516 = vunpack.c.l.b16 %v234
    %v517 = vunpack.c.l.b16 %v235
    %v518 = vunpack.c.l.b16 %v236
    %v519 = vunpack.c.l.b16 %v237
    %v520 = vunpack.c.l.b16 %v238
    %v521 = vunpack.c.l.b16 %v239
    %v522 = vunpack.c.l.b16 %v240
    %v523 = vunpack.c.l.b16 %v241
    %v524 = vunpack.c.l.b16 %v242
    %v525 = vunpack.c.l.b16 %v243
    %v526 = vunpack.c.l.b16 %v244
    %v527 = vpack.c.b16 %v512, %v511
    %v528 = vpack.c.b16 %v514, %v513
    %v529 = vpack.c.b16 %v516, %v515
    %v530 = vpack.c.b16 %v518, %v517
    %v531 = vpack.c.b16 %v520, %v519
    %v532 = vpack.c.b16 %v522, %v521
    %v533 = vpack.c.b16 %v524, %v523
    %v534 = vpack.c.b16 %v526, %v525
    %543 = vmatprep.subr.bf16.mxu0 0
    %544 = vmatpush1.bf16.msra.mxu0 %v527
    %545 = vmatprep.subr.bf16.mxu0 0
    %546 = vmatpush1.bf16.msra.mxu0 %v528
    %547 = vmatprep.subr.bf16.mxu0 0
    %548 = vmatpush1.bf16.msra.mxu0 %v529
    %549 = vmatprep.subr.bf16.mxu0 0
    %550 = vmatpush1.bf16.msra.mxu0 %v530
    %551 = vmatprep.subr.bf16.mxu0 0
    %552 = vmatpush1.bf16.msra.mxu0 %v531
    %553 = vmatprep.subr.bf16.mxu0 0
    %554 = vmatpush1.bf16.msra.mxu0 %v532
    %555 = vmatprep.subr.bf16.mxu0 0
    %556 = vmatpush1.bf16.msra.mxu0 %v533
    %557 = vmatprep.subr.bf16.mxu0 0
    %558 = vmatpush1.bf16.msra.mxu0 %v534
    %559 = vmatprep.subr.bf16.mxu0 0
    %560 = vmatpush1.bf16.msra.mxu0 0
    %561 = vmatprep.subr.bf16.mxu0 0
    %562 = vmatpush1.bf16.msra.mxu0 0
    %563 = vmatprep.subr.bf16.mxu0 0
    %564 = vmatpush1.bf16.msra.mxu0 0
    %565 = vmatprep.subr.bf16.mxu0 0
    %566 = vmatpush1.bf16.msra.mxu0 0
    %567 = vmatprep.subr.bf16.mxu0 0
    %568 = vmatpush1.bf16.msra.mxu0 0
    %569 = vmatprep.subr.bf16.mxu0 0
    %570 = vmatpush1.bf16.msra.mxu0 0
    %571 = vmatprep.subr.bf16.mxu0 0
    %572 = vmatpush1.bf16.msra.mxu0 0
    %573 = vmatprep.subr.bf16.mxu0 0
    %574 = vmatpush1.bf16.msra.mxu0 0
    %575 = vmatprep.mubr.bf16.mxu0 0
    %576 = vmatmul.mubr.bf16.gmra.mrb[0].mxu0 %v479
    %v577 = vpop.f32.mrb[0].mxu0
    %v578 = vadd.f32 0.0, %v577
    %v579 = vpop.f32.mrb[0].mxu0
    %v580 = vpop.f32.mrb[0].mxu0
    %v581 = vadd.f32 0.0, %v580
    %v582 = vpop.f32.mrb[0].mxu0
    %583 = vmatprep.mubr.bf16.mxu0 0
    %584 = vmatmul.mubr.bf16.gmra.mrb[0].mxu0 %v480
    %v585 = vpop.f32.mrb[0].mxu0
    %v586 = vadd.f32 0.0, %v585
    %v587 = vpop.f32.mrb[0].mxu0
    %v588 = vpop.f32.mrb[0].mxu0
    %v589 = vadd.f32 0.0, %v588
    %v590 = vpop.f32.mrb[0].mxu0
    %591 = vmatprep.mubr.bf16.mxu0 0
    %592 = vmatmul.mubr.bf16.gmra.mrb[0].mxu0 %v481
    %v593 = vpop.f32.mrb[0].mxu0
    %v594 = vadd.f32 0.0, %v593
    %v595 = vpop.f32.mrb[0].mxu0
    %v596 = vpop.f32.mrb[0].mxu0
    %v597 = vadd.f32 0.0, %v596
    %v598 = vpop.f32.mrb[0].mxu0
    %599 = vmatprep.mubr.bf16.mxu0 0
    %600 = vmatmul.mubr.bf16.gmra.mrb[0].mxu0 %v482
    %v601 = vpop.f32.mrb[0].mxu0
    %v602 = vadd.f32 0.0, %v601
    %v603 = vpop.f32.mrb[0].mxu0
    %v604 = vpop.f32.mrb[0].mxu0
    %v605 = vadd.f32 0.0, %v604
    %v606 = vpop.f32.mrb[0].mxu0
    %607 = vmatprep.mubr.bf16.mxu0 0
    %608 = vmatmul.mubr.bf16.gmra.mrb[0].mxu0 %v483
    %v609 = vpop.f32.mrb[0].mxu0
    %v610 = vadd.f32 0.0, %v609
    %v611 = vpop.f32.mrb[0].mxu0
    %v612 = vpop.f32.mrb[0].mxu0
    %v613 = vadd.f32 0.0, %v612
    %v614 = vpop.f32.mrb[0].mxu0
    %615 = vmatprep.mubr.bf16.mxu0 0
    %616 = vmatmul.mubr.bf16.gmra.mrb[0].mxu0 %v484
    %v617 = vpop.f32.mrb[0].mxu0
    %v618 = vadd.f32 0.0, %v617
    %v619 = vpop.f32.mrb[0].mxu0
    %v620 = vpop.f32.mrb[0].mxu0
    %v621 = vadd.f32 0.0, %v620
    %v622 = vpop.f32.mrb[0].mxu0
    %623 = vmatprep.mubr.bf16.mxu0 0
    %624 = vmatmul.mubr.bf16.gmra.mrb[0].mxu0 %v485
    %v625 = vpop.f32.mrb[0].mxu0
    %v626 = vadd.f32 0.0, %v625
    %v627 = vpop.f32.mrb[0].mxu0
    %v628 = vpop.f32.mrb[0].mxu0
    %v629 = vadd.f32 0.0, %v628
    %v630 = vpop.f32.mrb[0].mxu0
    %631 = vmatprep.mubr.bf16.mxu0 0
    %632 = vmatmul.mubr.bf16.gmra.mrb[0].mxu0 %v486
    %v633 = vpop.f32.mrb[0].mxu0
    %v634 = vadd.f32 0.0, %v633
    %v635 = vpop.f32.mrb[0].mxu0
    %v636 = vpop.f32.mrb[0].mxu0
    %v637 = vadd.f32 0.0, %v636
    %v638 = vpop.f32.mrb[0].mxu0
    %639 = vdwg.mxu0
    %v640 = vpack.c.bf16 %v581, %v578
    %v641 = vpack.c.bf16 %v589, %v586
    %v642 = vpack.c.bf16 %v597, %v594
    %v643 = vpack.c.bf16 %v605, %v602
    %v644 = vpack.c.bf16 %v613, %v610
    %v645 = vpack.c.bf16 %v621, %v618
    %v646 = vpack.c.bf16 %v629, %v626
    %v647 = vpack.c.bf16 %v637, %v634
    %v664 = vunpack.c.l.b16 %v245
    %v665 = vunpack.c.l.b16 %v246
    %v666 = vunpack.c.l.b16 %v247
    %v667 = vunpack.c.l.b16 %v248
    %v668 = vunpack.c.l.b16 %v249
    %v669 = vunpack.c.l.b16 %v250
    %v670 = vunpack.c.l.b16 %v251
    %v671 = vunpack.c.l.b16 %v252
    %v672 = vunpack.c.l.b16 %v253
    %v673 = vunpack.c.l.b16 %v254
    %v674 = vunpack.c.l.b16 %v255
    %v675 = vunpack.c.l.b16 %v256
    %v676 = vunpack.c.l.b16 %v257
    %v677 = vunpack.c.l.b16 %v258
    %v678 = vunpack.c.l.b16 %v259
    %v679 = vunpack.c.l.b16 %v260
    %v680 = vpack.c.b16 %v665, %v664
    %v681 = vpack.c.b16 %v667, %v666
    %v682 = vpack.c.b16 %v669, %v668
    %v683 = vpack.c.b16 %v671, %v670
    %v684 = vpack.c.b16 %v673, %v672
    %v685 = vpack.c.b16 %v675, %v674
    %v686 = vpack.c.b16 %v677, %v676
    %v687 = vpack.c.b16 %v679, %v678
    %v697 = vlaneseq
    %v698 = vshrl.u32 %v697, 7
    %v699 = vsub.s32 0, %v698
    %v700 = vrot.slane %v297, %v699
    %v734 = vunpack.c.l.b16 %v265
    %v735 = vunpack.c.l.b16 %v266
    %v736 = vunpack.c.l.b16 %v267
    %v737 = vunpack.c.l.b16 %v268
    %v738 = vunpack.c.l.b16 %v269
    %v739 = vunpack.c.l.b16 %v270
    %v740 = vunpack.c.l.b16 %v271
    %v741 = vunpack.c.l.b16 %v272
    %v742 = vunpack.c.l.b16 %v273
    %v743 = vunpack.c.l.b16 %v274
    %v744 = vunpack.c.l.b16 %v275
    %v745 = vunpack.c.l.b16 %v276
    %v746 = vunpack.c.l.b16 %v277
    %v747 = vunpack.c.l.b16 %v278
    %v748 = vunpack.c.l.b16 %v279
    %v749 = vunpack.c.l.b16 %v280
    %v750 = vunpack.c.l.b16 %v281
    %v751 = vunpack.c.l.b16 %v282
    %v752 = vunpack.c.l.b16 %v283
    %v753 = vunpack.c.l.b16 %v284
    %v754 = vunpack.c.l.b16 %v285
    %v755 = vunpack.c.l.b16 %v286
    %v756 = vunpack.c.l.b16 %v287
    %v757 = vunpack.c.l.b16 %v288
    %v758 = vunpack.c.l.b16 %v289
    %v759 = vunpack.c.l.b16 %v290
    %v760 = vunpack.c.l.b16 %v291
    %v761 = vunpack.c.l.b16 %v292
    %v762 = vunpack.c.l.b16 %v293
    %v763 = vunpack.c.l.b16 %v294
    %v764 = vunpack.c.l.b16 %v295
    %v765 = vunpack.c.l.b16 %v296
    %v766 = vpack.c.b16 %v735, %v734
    %v767 = vpack.c.b16 %v737, %v736
    %v768 = vpack.c.b16 %v739, %v738
    %v769 = vpack.c.b16 %v741, %v740
    %v770 = vpack.c.b16 %v743, %v742
    %v771 = vpack.c.b16 %v745, %v744
    %v772 = vpack.c.b16 %v747, %v746
    %v773 = vpack.c.b16 %v749, %v748
    %v774 = vpack.c.b16 %v751, %v750
    %v775 = vpack.c.b16 %v753, %v752
    %v776 = vpack.c.b16 %v755, %v754
    %v777 = vpack.c.b16 %v757, %v756
    %v778 = vpack.c.b16 %v759, %v758
    %v779 = vpack.c.b16 %v761, %v760
    %v780 = vpack.c.b16 %v763, %v762
    %v781 = vpack.c.b16 %v765, %v764
    %798 = vmatprep.subr.bf16.mxu0 0
    %799 = vmatpush1.bf16.msra.mxu0 %v766
    %800 = vmatprep.subr.bf16.mxu0 0
    %801 = vmatpush1.bf16.msra.mxu0 %v767
    %802 = vmatprep.subr.bf16.mxu0 0
    %803 = vmatpush1.bf16.msra.mxu0 %v768
    %804 = vmatprep.subr.bf16.mxu0 0
    %805 = vmatpush1.bf16.msra.mxu0 %v769
    %806 = vmatprep.subr.bf16.mxu0 0
    %807 = vmatpush1.bf16.msra.mxu0 %v770
    %808 = vmatprep.subr.bf16.mxu0 0
    %809 = vmatpush1.bf16.msra.mxu0 %v771
    %810 = vmatprep.subr.bf16.mxu0 0
    %811 = vmatpush1.bf16.msra.mxu0 %v772
    %812 = vmatprep.subr.bf16.mxu0 0
    %813 = vmatpush1.bf16.msra.mxu0 %v773
    %814 = vmatprep.subr.bf16.mxu0 0
    %815 = vmatpush1.bf16.msra.mxu0 %v774
    %816 = vmatprep.subr.bf16.mxu0 0
    %817 = vmatpush1.bf16.msra.mxu0 %v775
    %818 = vmatprep.subr.bf16.mxu0 0
    %819 = vmatpush1.bf16.msra.mxu0 %v776
    %820 = vmatprep.subr.bf16.mxu0 0
    %821 = vmatpush1.bf16.msra.mxu0 %v777
    %822 = vmatprep.subr.bf16.mxu0 0
    %823 = vmatpush1.bf16.msra.mxu0 %v778
    %824 = vmatprep.subr.bf16.mxu0 0
    %825 = vmatpush1.bf16.msra.mxu0 %v779
    %826 = vmatprep.subr.bf16.mxu0 0
    %827 = vmatpush1.bf16.msra.mxu0 %v780
    %828 = vmatprep.subr.bf16.mxu0 0
    %829 = vmatpush1.bf16.msra.mxu0 %v781
    %830 = vmatprep.mubr.bf16.mxu0 %v680
    %831 = vmatmul.mubr.bf16.gmra.mrb[0].mxu0 %v640
    %v832 = vpop.f32.mrb[0].mxu0
    %v833 = vadd.f32 %v700, %v832
    %v834 = vpop.f32.mrb[0].mxu0
    %v835 = vpop.f32.mrb[0].mxu0
    %v836 = vadd.f32 %v700, %v835
    %v837 = vpop.f32.mrb[0].mxu0
    %838 = vmatprep.mubr.bf16.mxu0 %v681
    %839 = vmatmul.mubr.bf16.gmra.mrb[0].mxu0 %v641
    %v840 = vpop.f32.mrb[0].mxu0
    %v841 = vadd.f32 %v700, %v840
    %v842 = vpop.f32.mrb[0].mxu0
    %v843 = vpop.f32.mrb[0].mxu0
    %v844 = vadd.f32 %v700, %v843
    %v845 = vpop.f32.mrb[0].mxu0
    %846 = vmatprep.mubr.bf16.mxu0 %v682
    %847 = vmatmul.mubr.bf16.gmra.mrb[0].mxu0 %v642
    %v848 = vpop.f32.mrb[0].mxu0
    %v849 = vadd.f32 %v700, %v848
    %v850 = vpop.f32.mrb[0].mxu0
    %v851 = vpop.f32.mrb[0].mxu0
    %v852 = vadd.f32 %v700, %v851
    %v853 = vpop.f32.mrb[0].mxu0
    %854 = vmatprep.mubr.bf16.mxu0 %v683
    %855 = vmatmul.mubr.bf16.gmra.mrb[0].mxu0 %v643
    %v856 = vpop.f32.mrb[0].mxu0
    %v857 = vadd.f32 %v700, %v856
    %v858 = vpop.f32.mrb[0].mxu0
    %v859 = vpop.f32.mrb[0].mxu0
    %v860 = vadd.f32 %v700, %v859
    %v861 = vpop.f32.mrb[0].mxu0
    %862 = vmatprep.mubr.bf16.mxu0 %v684
    %863 = vmatmul.mubr.bf16.gmra.mrb[0].mxu0 %v644
    %v864 = vpop.f32.mrb[0].mxu0
    %v865 = vadd.f32 %v700, %v864
    %v866 = vpop.f32.mrb[0].mxu0
    %v867 = vpop.f32.mrb[0].mxu0
    %v868 = vadd.f32 %v700, %v867
    %v869 = vpop.f32.mrb[0].mxu0
    %870 = vmatprep.mubr.bf16.mxu0 %v685
    %871 = vmatmul.mubr.bf16.gmra.mrb[0].mxu0 %v645
    %v872 = vpop.f32.mrb[0].mxu0
    %v873 = vadd.f32 %v700, %v872
    %v874 = vpop.f32.mrb[0].mxu0
    %v875 = vpop.f32.mrb[0].mxu0
    %v876 = vadd.f32 %v700, %v875
    %v877 = vpop.f32.mrb[0].mxu0
    %878 = vmatprep.mubr.bf16.mxu0 %v686
    %879 = vmatmul.mubr.bf16.gmra.mrb[0].mxu0 %v646
    %v880 = vpop.f32.mrb[0].mxu0
    %v881 = vadd.f32 %v700, %v880
    %v882 = vpop.f32.mrb[0].mxu0
    %v883 = vpop.f32.mrb[0].mxu0
    %v884 = vadd.f32 %v700, %v883
    %v885 = vpop.f32.mrb[0].mxu0
    %886 = vmatprep.mubr.bf16.mxu0 %v687
    %887 = vmatmul.mubr.bf16.gmra.mrb[0].mxu0 %v647
    %v888 = vpop.f32.mrb[0].mxu0
    %v889 = vadd.f32 %v700, %v888
    %v890 = vpop.f32.mrb[0].mxu0
    %v891 = vpop.f32.mrb[0].mxu0
    %v892 = vadd.f32 %v700, %v891
    %v893 = vpop.f32.mrb[0].mxu0
    %894 = vdwg.mxu0
    %v895 = vmax.f32 %v833, 0.0
    %v896 = vmax.f32 %v836, 0.0
    %v897 = vmax.f32 %v841, 0.0
    %v898 = vmax.f32 %v844, 0.0
    %v899 = vmax.f32 %v849, 0.0
    %v900 = vmax.f32 %v852, 0.0
    %v901 = vmax.f32 %v857, 0.0
    %v902 = vmax.f32 %v860, 0.0
    %v903 = vmax.f32 %v865, 0.0
    %v904 = vmax.f32 %v868, 0.0
    %v905 = vmax.f32 %v873, 0.0
    %v906 = vmax.f32 %v876, 0.0
    %v907 = vmax.f32 %v881, 0.0
    %v908 = vmax.f32 %v884, 0.0
    %v909 = vmax.f32 %v889, 0.0
    %v910 = vmax.f32 %v892, 0.0
    %v927 = vunpack.c.l.b16 %v213
    %v928 = vunpack.c.l.b16 %v214
    %v929 = vunpack.c.l.b16 %v215
    %v930 = vunpack.c.l.b16 %v216
    %v931 = vunpack.c.l.b16 %v217
    %v932 = vunpack.c.l.b16 %v218
    %v933 = vunpack.c.l.b16 %v219
    %v934 = vunpack.c.l.b16 %v220
    %v935 = vunpack.c.l.b16 %v221
    %v936 = vunpack.c.l.b16 %v222
    %v937 = vunpack.c.l.b16 %v223
    %v938 = vunpack.c.l.b16 %v224
    %v939 = vunpack.c.l.b16 %v225
    %v940 = vunpack.c.l.b16 %v226
    %v941 = vunpack.c.l.b16 %v227
    %v942 = vunpack.c.l.b16 %v228
    %v943 = vpack.c.b16 %v928, %v927
    %v944 = vpack.c.b16 %v930, %v929
    %v945 = vpack.c.b16 %v932, %v931
    %v946 = vpack.c.b16 %v934, %v933
    %v947 = vpack.c.b16 %v936, %v935
    %v948 = vpack.c.b16 %v938, %v937
    %v949 = vpack.c.b16 %v940, %v939
    %v950 = vpack.c.b16 %v942, %v941
    %959 = vmatprep.subr.bf16.mxu0 0
    %960 = vmatpush1.bf16.msra.mxu0 %v680
    %961 = vmatprep.subr.bf16.mxu0 0
    %962 = vmatpush1.bf16.msra.mxu0 %v681
    %963 = vmatprep.subr.bf16.mxu0 0
    %964 = vmatpush1.bf16.msra.mxu0 %v682
    %965 = vmatprep.subr.bf16.mxu0 0
    %966 = vmatpush1.bf16.msra.mxu0 %v683
    %967 = vmatprep.subr.bf16.mxu0 0
    %968 = vmatpush1.bf16.msra.mxu0 %v684
    %969 = vmatprep.subr.bf16.mxu0 0
    %970 = vmatpush1.bf16.msra.mxu0 %v685
    %971 = vmatprep.subr.bf16.mxu0 0
    %972 = vmatpush1.bf16.msra.mxu0 %v686
    %973 = vmatprep.subr.bf16.mxu0 0
    %974 = vmatpush1.bf16.msra.mxu0 %v687
    %975 = vmatprep.subr.bf16.mxu0 0
    %976 = vmatpush1.bf16.msra.mxu0 0
    %977 = vmatprep.subr.bf16.mxu0 0
    %978 = vmatpush1.bf16.msra.mxu0 0
    %979 = vmatprep.subr.bf16.mxu0 0
    %980 = vmatpush1.bf16.msra.mxu0 0
    %981 = vmatprep.subr.bf16.mxu0 0
    %982 = vmatpush1.bf16.msra.mxu0 0
    %983 = vmatprep.subr.bf16.mxu0 0
    %984 = vmatpush1.bf16.msra.mxu0 0
    %985 = vmatprep.subr.bf16.mxu0 0
    %986 = vmatpush1.bf16.msra.mxu0 0
    %987 = vmatprep.subr.bf16.mxu0 0
    %988 = vmatpush1.bf16.msra.mxu0 0
    %989 = vmatprep.subr.bf16.mxu0 0
    %990 = vmatpush1.bf16.msra.mxu0 0
    %991 = vmatprep.mubr.bf16.mxu0 0
    %992 = vmatmul.mubr.bf16.gmra.mrb[0].mxu0 %v943
    %v993 = vpop.f32.mrb[0].mxu0
    %v994 = vadd.f32 0.0, %v993
    %v995 = vpop.f32.mrb[0].mxu0
    %v996 = vpop.f32.mrb[0].mxu0
    %v997 = vadd.f32 0.0, %v996
    %v998 = vpop.f32.mrb[0].mxu0
    %999 = vmatprep.mubr.bf16.mxu0 0
    %1000 = vmatmul.mubr.bf16.gmra.mrb[0].mxu0 %v944
    %v1001 = vpop.f32.mrb[0].mxu0
    %v1002 = vadd.f32 0.0, %v1001
    %v1003 = vpop.f32.mrb[0].mxu0
    %v1004 = vpop.f32.mrb[0].mxu0
    %v1005 = vadd.f32 0.0, %v1004
    %v1006 = vpop.f32.mrb[0].mxu0
    %1007 = vmatprep.mubr.bf16.mxu0 0
    %1008 = vmatmul.mubr.bf16.gmra.mrb[0].mxu0 %v945
    %v1009 = vpop.f32.mrb[0].mxu0
    %v1010 = vadd.f32 0.0, %v1009
    %v1011 = vpop.f32.mrb[0].mxu0
    %v1012 = vpop.f32.mrb[0].mxu0
    %v1013 = vadd.f32 0.0, %v1012
    %v1014 = vpop.f32.mrb[0].mxu0
    %1015 = vmatprep.mubr.bf16.mxu0 0
    %1016 = vmatmul.mubr.bf16.gmra.mrb[0].mxu0 %v946
    %v1017 = vpop.f32.mrb[0].mxu0
    %v1018 = vadd.f32 0.0, %v1017
    %v1019 = vpop.f32.mrb[0].mxu0
    %v1020 = vpop.f32.mrb[0].mxu0
    %v1021 = vadd.f32 0.0, %v1020
    %v1022 = vpop.f32.mrb[0].mxu0
    %1023 = vmatprep.mubr.bf16.mxu0 0
    %1024 = vmatmul.mubr.bf16.gmra.mrb[0].mxu0 %v947
    %v1025 = vpop.f32.mrb[0].mxu0
    %v1026 = vadd.f32 0.0, %v1025
    %v1027 = vpop.f32.mrb[0].mxu0
    %v1028 = vpop.f32.mrb[0].mxu0
    %v1029 = vadd.f32 0.0, %v1028
    %v1030 = vpop.f32.mrb[0].mxu0
    %1031 = vmatprep.mubr.bf16.mxu0 0
    %1032 = vmatmul.mubr.bf16.gmra.mrb[0].mxu0 %v948
    %v1033 = vpop.f32.mrb[0].mxu0
    %v1034 = vadd.f32 0.0, %v1033
    %v1035 = vpop.f32.mrb[0].mxu0
    %v1036 = vpop.f32.mrb[0].mxu0
    %v1037 = vadd.f32 0.0, %v1036
    %v1038 = vpop.f32.mrb[0].mxu0
    %1039 = vmatprep.mubr.bf16.mxu0 0
    %1040 = vmatmul.mubr.bf16.gmra.mrb[0].mxu0 %v949
    %v1041 = vpop.f32.mrb[0].mxu0
    %v1042 = vadd.f32 0.0, %v1041
    %v1043 = vpop.f32.mrb[0].mxu0
    %v1044 = vpop.f32.mrb[0].mxu0
    %v1045 = vadd.f32 0.0, %v1044
    %v1046 = vpop.f32.mrb[0].mxu0
    %1047 = vmatprep.mubr.bf16.mxu0 0
    %1048 = vmatmul.mubr.bf16.gmra.mrb[0].mxu0 %v950
    %v1049 = vpop.f32.mrb[0].mxu0
    %v1050 = vadd.f32 0.0, %v1049
    %v1051 = vpop.f32.mrb[0].mxu0
    %v1052 = vpop.f32.mrb[0].mxu0
    %v1053 = vadd.f32 0.0, %v1052
    %v1054 = vpop.f32.mrb[0].mxu0
    %1055 = vdwg.mxu0
    %v1056 = vpack.c.bf16 %v997, %v994
    %v1057 = vpack.c.bf16 %v1005, %v1002
    %v1058 = vpack.c.bf16 %v1013, %v1010
    %v1059 = vpack.c.bf16 %v1021, %v1018
    %v1060 = vpack.c.bf16 %v1029, %v1026
    %v1061 = vpack.c.bf16 %v1037, %v1034
    %v1062 = vpack.c.bf16 %v1045, %v1042
    %v1063 = vpack.c.bf16 %v1053, %v1050
    %v1065 = vlaneseq
    %v1066 = vshrl.u32 %v1065, 7
    %v1067 = vsub.s32 0, %v1066
    %v1068 = vrot.slane %v330, %v1067
    %v1102 = vunpack.c.l.b16 %v298
    %v1103 = vunpack.c.l.b16 %v299
    %v1104 = vunpack.c.l.b16 %v300
    %v1105 = vunpack.c.l.b16 %v301
    %v1106 = vunpack.c.l.b16 %v302
    %v1107 = vunpack.c.l.b16 %v303
    %v1108 = vunpack.c.l.b16 %v304
    %v1109 = vunpack.c.l.b16 %v305
    %v1110 = vunpack.c.l.b16 %v306
    %v1111 = vunpack.c.l.b16 %v307
    %v1112 = vunpack.c.l.b16 %v308
    %v1113 = vunpack.c.l.b16 %v309
    %v1114 = vunpack.c.l.b16 %v310
    %v1115 = vunpack.c.l.b16 %v311
    %v1116 = vunpack.c.l.b16 %v312
    %v1117 = vunpack.c.l.b16 %v313
    %v1118 = vunpack.c.l.b16 %v314
    %v1119 = vunpack.c.l.b16 %v315
    %v1120 = vunpack.c.l.b16 %v316
    %v1121 = vunpack.c.l.b16 %v317
    %v1122 = vunpack.c.l.b16 %v318
    %v1123 = vunpack.c.l.b16 %v319
    %v1124 = vunpack.c.l.b16 %v320
    %v1125 = vunpack.c.l.b16 %v321
    %v1126 = vunpack.c.l.b16 %v322
    %v1127 = vunpack.c.l.b16 %v323
    %v1128 = vunpack.c.l.b16 %v324
    %v1129 = vunpack.c.l.b16 %v325
    %v1130 = vunpack.c.l.b16 %v326
    %v1131 = vunpack.c.l.b16 %v327
    %v1132 = vunpack.c.l.b16 %v328
    %v1133 = vunpack.c.l.b16 %v329
    %v1134 = vpack.c.b16 %v1103, %v1102
    %v1135 = vpack.c.b16 %v1105, %v1104
    %v1136 = vpack.c.b16 %v1107, %v1106
    %v1137 = vpack.c.b16 %v1109, %v1108
    %v1138 = vpack.c.b16 %v1111, %v1110
    %v1139 = vpack.c.b16 %v1113, %v1112
    %v1140 = vpack.c.b16 %v1115, %v1114
    %v1141 = vpack.c.b16 %v1117, %v1116
    %v1142 = vpack.c.b16 %v1119, %v1118
    %v1143 = vpack.c.b16 %v1121, %v1120
    %v1144 = vpack.c.b16 %v1123, %v1122
    %v1145 = vpack.c.b16 %v1125, %v1124
    %v1146 = vpack.c.b16 %v1127, %v1126
    %v1147 = vpack.c.b16 %v1129, %v1128
    %v1148 = vpack.c.b16 %v1131, %v1130
    %v1149 = vpack.c.b16 %v1133, %v1132
    %1166 = vmatprep.subr.bf16.mxu0 0
    %1167 = vmatpush1.bf16.msra.mxu0 %v1134
    %1168 = vmatprep.subr.bf16.mxu0 0
    %1169 = vmatpush1.bf16.msra.mxu0 %v1135
    %1170 = vmatprep.subr.bf16.mxu0 0
    %1171 = vmatpush1.bf16.msra.mxu0 %v1136
    %1172 = vmatprep.subr.bf16.mxu0 0
    %1173 = vmatpush1.bf16.msra.mxu0 %v1137
    %1174 = vmatprep.subr.bf16.mxu0 0
    %1175 = vmatpush1.bf16.msra.mxu0 %v1138
    %1176 = vmatprep.subr.bf16.mxu0 0
    %1177 = vmatpush1.bf16.msra.mxu0 %v1139
    %1178 = vmatprep.subr.bf16.mxu0 0
    %1179 = vmatpush1.bf16.msra.mxu0 %v1140
    %1180 = vmatprep.subr.bf16.mxu0 0
    %1181 = vmatpush1.bf16.msra.mxu0 %v1141
    %1182 = vmatprep.subr.bf16.mxu0 0
    %1183 = vmatpush1.bf16.msra.mxu0 %v1142
    %1184 = vmatprep.subr.bf16.mxu0 0
    %1185 = vmatpush1.bf16.msra.mxu0 %v1143
    %1186 = vmatprep.subr.bf16.mxu0 0
    %1187 = vmatpush1.bf16.msra.mxu0 %v1144
    %1188 = vmatprep.subr.bf16.mxu0 0
    %1189 = vmatpush1.bf16.msra.mxu0 %v1145
    %1190 = vmatprep.subr.bf16.mxu0 0
    %1191 = vmatpush1.bf16.msra.mxu0 %v1146
    %1192 = vmatprep.subr.bf16.mxu0 0
    %1193 = vmatpush1.bf16.msra.mxu0 %v1147
    %1194 = vmatprep.subr.bf16.mxu0 0
    %1195 = vmatpush1.bf16.msra.mxu0 %v1148
    %1196 = vmatprep.subr.bf16.mxu0 0
    %1197 = vmatpush1.bf16.msra.mxu0 %v1149
    %1198 = vmatprep.mubr.bf16.mxu0 %v527
    %1199 = vmatmul.mubr.bf16.gmra.mrb[0].mxu0 %v1056
    %v1200 = vpop.f32.mrb[0].mxu0
    %v1201 = vadd.f32 %v1068, %v1200
    %v1202 = vpop.f32.mrb[0].mxu0
    %v1203 = vpop.f32.mrb[0].mxu0
    %v1204 = vadd.f32 %v1068, %v1203
    %v1205 = vpop.f32.mrb[0].mxu0
    %1206 = vmatprep.mubr.bf16.mxu0 %v528
    %1207 = vmatmul.mubr.bf16.gmra.mrb[0].mxu0 %v1057
    %v1208 = vpop.f32.mrb[0].mxu0
    %v1209 = vadd.f32 %v1068, %v1208
    %v1210 = vpop.f32.mrb[0].mxu0
    %v1211 = vpop.f32.mrb[0].mxu0
    %v1212 = vadd.f32 %v1068, %v1211
    %v1213 = vpop.f32.mrb[0].mxu0
    %1214 = vmatprep.mubr.bf16.mxu0 %v529
    %1215 = vmatmul.mubr.bf16.gmra.mrb[0].mxu0 %v1058
    %v1216 = vpop.f32.mrb[0].mxu0
    %v1217 = vadd.f32 %v1068, %v1216
    %v1218 = vpop.f32.mrb[0].mxu0
    %v1219 = vpop.f32.mrb[0].mxu0
    %v1220 = vadd.f32 %v1068, %v1219
    %v1221 = vpop.f32.mrb[0].mxu0
    %1222 = vmatprep.mubr.bf16.mxu0 %v530
    %1223 = vmatmul.mubr.bf16.gmra.mrb[0].mxu0 %v1059
    %v1224 = vpop.f32.mrb[0].mxu0
    %v1225 = vadd.f32 %v1068, %v1224
    %v1226 = vpop.f32.mrb[0].mxu0
    %v1227 = vpop.f32.mrb[0].mxu0
    %v1228 = vadd.f32 %v1068, %v1227
    %v1229 = vpop.f32.mrb[0].mxu0
    %1230 = vmatprep.mubr.bf16.mxu0 %v531
    %1231 = vmatmul.mubr.bf16.gmra.mrb[0].mxu0 %v1060
    %v1232 = vpop.f32.mrb[0].mxu0
    %v1233 = vadd.f32 %v1068, %v1232
    %v1234 = vpop.f32.mrb[0].mxu0
    %v1235 = vpop.f32.mrb[0].mxu0
    %v1236 = vadd.f32 %v1068, %v1235
    %v1237 = vpop.f32.mrb[0].mxu0
    %1238 = vmatprep.mubr.bf16.mxu0 %v532
    %1239 = vmatmul.mubr.bf16.gmra.mrb[0].mxu0 %v1061
    %v1240 = vpop.f32.mrb[0].mxu0
    %v1241 = vadd.f32 %v1068, %v1240
    %v1242 = vpop.f32.mrb[0].mxu0
    %v1243 = vpop.f32.mrb[0].mxu0
    %v1244 = vadd.f32 %v1068, %v1243
    %v1245 = vpop.f32.mrb[0].mxu0
    %1246 = vmatprep.mubr.bf16.mxu0 %v533
    %1247 = vmatmul.mubr.bf16.gmra.mrb[0].mxu0 %v1062
    %v1248 = vpop.f32.mrb[0].mxu0
    %v1249 = vadd.f32 %v1068, %v1248
    %v1250 = vpop.f32.mrb[0].mxu0
    %v1251 = vpop.f32.mrb[0].mxu0
    %v1252 = vadd.f32 %v1068, %v1251
    %v1253 = vpop.f32.mrb[0].mxu0
    %1254 = vmatprep.mubr.bf16.mxu0 %v534
    %1255 = vmatmul.mubr.bf16.gmra.mrb[0].mxu0 %v1063
    %v1256 = vpop.f32.mrb[0].mxu0
    %v1257 = vadd.f32 %v1068, %v1256
    %v1258 = vpop.f32.mrb[0].mxu0
    %v1259 = vpop.f32.mrb[0].mxu0
    %v1260 = vadd.f32 %v1068, %v1259
    %v1261 = vpop.f32.mrb[0].mxu0
    %1262 = vdwg.mxu0
    %v1263 = vmax.f32 %v1201, 0.0
    %v1264 = vmax.f32 %v1204, 0.0
    %v1265 = vmax.f32 %v1209, 0.0
    %v1266 = vmax.f32 %v1212, 0.0
    %v1267 = vmax.f32 %v1217, 0.0
    %v1268 = vmax.f32 %v1220, 0.0
    %v1269 = vmax.f32 %v1225, 0.0
    %v1270 = vmax.f32 %v1228, 0.0
    %v1271 = vmax.f32 %v1233, 0.0
    %v1272 = vmax.f32 %v1236, 0.0
    %v1273 = vmax.f32 %v1241, 0.0
    %v1274 = vmax.f32 %v1244, 0.0
    %v1275 = vmax.f32 %v1249, 0.0
    %v1276 = vmax.f32 %v1252, 0.0
    %v1277 = vmax.f32 %v1257, 0.0
    %v1278 = vmax.f32 %v1260, 0.0
    %v1279 = vpack.c.bf16 %v896, %v895
    %v1280 = vpack.c.bf16 %v898, %v897
    %v1281 = vpack.c.bf16 %v900, %v899
    %v1282 = vpack.c.bf16 %v902, %v901
    %v1283 = vpack.c.bf16 %v904, %v903
    %v1284 = vpack.c.bf16 %v906, %v905
    %v1285 = vpack.c.bf16 %v908, %v907
    %v1286 = vpack.c.bf16 %v910, %v909
    %v1287 = vpack.c.bf16 %v1264, %v1263
    %v1288 = vpack.c.bf16 %v1266, %v1265
    %v1289 = vpack.c.bf16 %v1268, %v1267
    %v1290 = vpack.c.bf16 %v1270, %v1269
    %v1291 = vpack.c.bf16 %v1272, %v1271
    %v1292 = vpack.c.bf16 %v1274, %v1273
    %v1293 = vpack.c.bf16 %v1276, %v1275
    %v1294 = vpack.c.bf16 %v1278, %v1277
    %1295 = vmatprep.subr.bf16.mxu0 0
    %1296 = vmatpush1.bf16.msra.mxu0 %v1287
    %1297 = vmatprep.subr.bf16.mxu0 0
    %1298 = vmatpush1.bf16.msra.mxu0 %v1288
    %1299 = vmatprep.subr.bf16.mxu0 0
    %1300 = vmatpush1.bf16.msra.mxu0 %v1289
    %1301 = vmatprep.subr.bf16.mxu0 0
    %1302 = vmatpush1.bf16.msra.mxu0 %v1290
    %1303 = vmatprep.subr.bf16.mxu0 0
    %1304 = vmatpush1.bf16.msra.mxu0 %v1291
    %1305 = vmatprep.subr.bf16.mxu0 0
    %1306 = vmatpush1.bf16.msra.mxu0 %v1292
    %1307 = vmatprep.subr.bf16.mxu0 0
    %1308 = vmatpush1.bf16.msra.mxu0 %v1293
    %1309 = vmatprep.subr.bf16.mxu0 0
    %1310 = vmatpush1.bf16.msra.mxu0 %v1294
    %1311 = vmatprep.subr.bf16.mxu0 0
    %1312 = vmatpush1.bf16.msra.mxu0 0
    %1313 = vmatprep.subr.bf16.mxu0 0
    %1314 = vmatpush1.bf16.msra.mxu0 0
    %1315 = vmatprep.subr.bf16.mxu0 0
    %1316 = vmatpush1.bf16.msra.mxu0 0
    %1317 = vmatprep.subr.bf16.mxu0 0
    %1318 = vmatpush1.bf16.msra.mxu0 0
    %1319 = vmatprep.subr.bf16.mxu0 0
    %1320 = vmatpush1.bf16.msra.mxu0 0
    %1321 = vmatprep.subr.bf16.mxu0 0
    %1322 = vmatpush1.bf16.msra.mxu0 0
    %1323 = vmatprep.subr.bf16.mxu0 0
    %1324 = vmatpush1.bf16.msra.mxu0 0
    %1325 = vmatprep.subr.bf16.mxu0 0
    %1326 = vmatpush1.bf16.msra.mxu0 0
    %1327 = vmatprep.mubr.bf16.mxu0 0
    %1328 = vmatmul.mubr.bf16.gmra.mrb[0].mxu0 %v479
    %v1329 = vpop.f32.mrb[0].mxu0
    %v1330 = vadd.f32 0.0, %v1329
    %v1331 = vpop.f32.mrb[0].mxu0
    %v1332 = vpop.f32.mrb[0].mxu0
    %v1333 = vadd.f32 0.0, %v1332
    %v1334 = vpop.f32.mrb[0].mxu0
    %1335 = vmatprep.mubr.bf16.mxu0 0
    %1336 = vmatmul.mubr.bf16.gmra.mrb[0].mxu0 %v480
    %v1337 = vpop.f32.mrb[0].mxu0
    %v1338 = vadd.f32 0.0, %v1337
    %v1339 = vpop.f32.mrb[0].mxu0
    %v1340 = vpop.f32.mrb[0].mxu0
    %v1341 = vadd.f32 0.0, %v1340
    %v1342 = vpop.f32.mrb[0].mxu0
    %1343 = vmatprep.mubr.bf16.mxu0 0
    %1344 = vmatmul.mubr.bf16.gmra.mrb[0].mxu0 %v481
    %v1345 = vpop.f32.mrb[0].mxu0
    %v1346 = vadd.f32 0.0, %v1345
    %v1347 = vpop.f32.mrb[0].mxu0
    %v1348 = vpop.f32.mrb[0].mxu0
    %v1349 = vadd.f32 0.0, %v1348
    %v1350 = vpop.f32.mrb[0].mxu0
    %1351 = vmatprep.mubr.bf16.mxu0 0
    %1352 = vmatmul.mubr.bf16.gmra.mrb[0].mxu0 %v482
    %v1353 = vpop.f32.mrb[0].mxu0
    %v1354 = vadd.f32 0.0, %v1353
    %v1355 = vpop.f32.mrb[0].mxu0
    %v1356 = vpop.f32.mrb[0].mxu0
    %v1357 = vadd.f32 0.0, %v1356
    %v1358 = vpop.f32.mrb[0].mxu0
    %1359 = vmatprep.mubr.bf16.mxu0 0
    %1360 = vmatmul.mubr.bf16.gmra.mrb[0].mxu0 %v483
    %v1361 = vpop.f32.mrb[0].mxu0
    %v1362 = vadd.f32 0.0, %v1361
    %v1363 = vpop.f32.mrb[0].mxu0
    %v1364 = vpop.f32.mrb[0].mxu0
    %v1365 = vadd.f32 0.0, %v1364
    %v1366 = vpop.f32.mrb[0].mxu0
    %1367 = vmatprep.mubr.bf16.mxu0 0
    %1368 = vmatmul.mubr.bf16.gmra.mrb[0].mxu0 %v484
    %v1369 = vpop.f32.mrb[0].mxu0
    %v1370 = vadd.f32 0.0, %v1369
    %v1371 = vpop.f32.mrb[0].mxu0
    %v1372 = vpop.f32.mrb[0].mxu0
    %v1373 = vadd.f32 0.0, %v1372
    %v1374 = vpop.f32.mrb[0].mxu0
    %1375 = vmatprep.mubr.bf16.mxu0 0
    %1376 = vmatmul.mubr.bf16.gmra.mrb[0].mxu0 %v485
    %v1377 = vpop.f32.mrb[0].mxu0
    %v1378 = vadd.f32 0.0, %v1377
    %v1379 = vpop.f32.mrb[0].mxu0
    %v1380 = vpop.f32.mrb[0].mxu0
    %v1381 = vadd.f32 0.0, %v1380
    %v1382 = vpop.f32.mrb[0].mxu0
    %1383 = vmatprep.mubr.bf16.mxu0 0
    %1384 = vmatmul.mubr.bf16.gmra.mrb[0].mxu0 %v486
    %v1385 = vpop.f32.mrb[0].mxu0
    %v1386 = vadd.f32 0.0, %v1385
    %v1387 = vpop.f32.mrb[0].mxu0
    %v1388 = vpop.f32.mrb[0].mxu0
    %v1389 = vadd.f32 0.0, %v1388
    %v1390 = vpop.f32.mrb[0].mxu0
    %1391 = vdwg.mxu0
    %v1392 = vpack.c.bf16 %v1333, %v1330
    %v1393 = vpack.c.bf16 %v1341, %v1338
    %v1394 = vpack.c.bf16 %v1349, %v1346
    %v1395 = vpack.c.bf16 %v1357, %v1354
    %v1396 = vpack.c.bf16 %v1365, %v1362
    %v1397 = vpack.c.bf16 %v1373, %v1370
    %v1398 = vpack.c.bf16 %v1381, %v1378
    %v1399 = vpack.c.bf16 %v1389, %v1386
    %v1401 = vlaneseq
    %v1402 = vshrl.u32 %v1401, 7
    %v1403 = vsub.s32 0, %v1402
    %v1404 = vrot.slane %v363, %v1403
    %v1438 = vunpack.c.l.b16 %v331
    %v1439 = vunpack.c.l.b16 %v332
    %v1440 = vunpack.c.l.b16 %v333
    %v1441 = vunpack.c.l.b16 %v334
    %v1442 = vunpack.c.l.b16 %v335
    %v1443 = vunpack.c.l.b16 %v336
    %v1444 = vunpack.c.l.b16 %v337
    %v1445 = vunpack.c.l.b16 %v338
    %v1446 = vunpack.c.l.b16 %v339
    %v1447 = vunpack.c.l.b16 %v340
    %v1448 = vunpack.c.l.b16 %v341
    %v1449 = vunpack.c.l.b16 %v342
    %v1450 = vunpack.c.l.b16 %v343
    %v1451 = vunpack.c.l.b16 %v344
    %v1452 = vunpack.c.l.b16 %v345
    %v1453 = vunpack.c.l.b16 %v346
    %v1454 = vunpack.c.l.b16 %v347
    %v1455 = vunpack.c.l.b16 %v348
    %v1456 = vunpack.c.l.b16 %v349
    %v1457 = vunpack.c.l.b16 %v350
    %v1458 = vunpack.c.l.b16 %v351
    %v1459 = vunpack.c.l.b16 %v352
    %v1460 = vunpack.c.l.b16 %v353
    %v1461 = vunpack.c.l.b16 %v354
    %v1462 = vunpack.c.l.b16 %v355
    %v1463 = vunpack.c.l.b16 %v356
    %v1464 = vunpack.c.l.b16 %v357
    %v1465 = vunpack.c.l.b16 %v358
    %v1466 = vunpack.c.l.b16 %v359
    %v1467 = vunpack.c.l.b16 %v360
    %v1468 = vunpack.c.l.b16 %v361
    %v1469 = vunpack.c.l.b16 %v362
    %v1470 = vpack.c.b16 %v1439, %v1438
    %v1471 = vpack.c.b16 %v1441, %v1440
    %v1472 = vpack.c.b16 %v1443, %v1442
    %v1473 = vpack.c.b16 %v1445, %v1444
    %v1474 = vpack.c.b16 %v1447, %v1446
    %v1475 = vpack.c.b16 %v1449, %v1448
    %v1476 = vpack.c.b16 %v1451, %v1450
    %v1477 = vpack.c.b16 %v1453, %v1452
    %v1478 = vpack.c.b16 %v1455, %v1454
    %v1479 = vpack.c.b16 %v1457, %v1456
    %v1480 = vpack.c.b16 %v1459, %v1458
    %v1481 = vpack.c.b16 %v1461, %v1460
    %v1482 = vpack.c.b16 %v1463, %v1462
    %v1483 = vpack.c.b16 %v1465, %v1464
    %v1484 = vpack.c.b16 %v1467, %v1466
    %v1485 = vpack.c.b16 %v1469, %v1468
    %1502 = vmatprep.subr.bf16.mxu0 0
    %1503 = vmatpush1.bf16.msra.mxu0 %v1470
    %1504 = vmatprep.subr.bf16.mxu0 0
    %1505 = vmatpush1.bf16.msra.mxu0 %v1471
    %1506 = vmatprep.subr.bf16.mxu0 0
    %1507 = vmatpush1.bf16.msra.mxu0 %v1472
    %1508 = vmatprep.subr.bf16.mxu0 0
    %1509 = vmatpush1.bf16.msra.mxu0 %v1473
    %1510 = vmatprep.subr.bf16.mxu0 0
    %1511 = vmatpush1.bf16.msra.mxu0 %v1474
    %1512 = vmatprep.subr.bf16.mxu0 0
    %1513 = vmatpush1.bf16.msra.mxu0 %v1475
    %1514 = vmatprep.subr.bf16.mxu0 0
    %1515 = vmatpush1.bf16.msra.mxu0 %v1476
    %1516 = vmatprep.subr.bf16.mxu0 0
    %1517 = vmatpush1.bf16.msra.mxu0 %v1477
    %1518 = vmatprep.subr.bf16.mxu0 0
    %1519 = vmatpush1.bf16.msra.mxu0 %v1478
    %1520 = vmatprep.subr.bf16.mxu0 0
    %1521 = vmatpush1.bf16.msra.mxu0 %v1479
    %1522 = vmatprep.subr.bf16.mxu0 0
    %1523 = vmatpush1.bf16.msra.mxu0 %v1480
    %1524 = vmatprep.subr.bf16.mxu0 0
    %1525 = vmatpush1.bf16.msra.mxu0 %v1481
    %1526 = vmatprep.subr.bf16.mxu0 0
    %1527 = vmatpush1.bf16.msra.mxu0 %v1482
    %1528 = vmatprep.subr.bf16.mxu0 0
    %1529 = vmatpush1.bf16.msra.mxu0 %v1483
    %1530 = vmatprep.subr.bf16.mxu0 0
    %1531 = vmatpush1.bf16.msra.mxu0 %v1484
    %1532 = vmatprep.subr.bf16.mxu0 0
    %1533 = vmatpush1.bf16.msra.mxu0 %v1485
    %1534 = vmatprep.mubr.bf16.mxu0 %v1279
    %1535 = vmatmul.mubr.bf16.gmra.mrb[0].mxu0 %v1392
    %v1536 = vpop.f32.mrb[0].mxu0
    %v1537 = vadd.f32 %v1404, %v1536
    %v1538 = vpop.f32.mrb[0].mxu0
    %v1539 = vpop.f32.mrb[0].mxu0
    %v1540 = vadd.f32 %v1404, %v1539
    %v1541 = vpop.f32.mrb[0].mxu0
    %1542 = vmatprep.mubr.bf16.mxu0 %v1280
    %1543 = vmatmul.mubr.bf16.gmra.mrb[0].mxu0 %v1393
    %v1544 = vpop.f32.mrb[0].mxu0
    %v1545 = vadd.f32 %v1404, %v1544
    %v1546 = vpop.f32.mrb[0].mxu0
    %v1547 = vpop.f32.mrb[0].mxu0
    %v1548 = vadd.f32 %v1404, %v1547
    %v1549 = vpop.f32.mrb[0].mxu0
    %1550 = vmatprep.mubr.bf16.mxu0 %v1281
    %1551 = vmatmul.mubr.bf16.gmra.mrb[0].mxu0 %v1394
    %v1552 = vpop.f32.mrb[0].mxu0
    %v1553 = vadd.f32 %v1404, %v1552
    %v1554 = vpop.f32.mrb[0].mxu0
    %v1555 = vpop.f32.mrb[0].mxu0
    %v1556 = vadd.f32 %v1404, %v1555
    %v1557 = vpop.f32.mrb[0].mxu0
    %1558 = vmatprep.mubr.bf16.mxu0 %v1282
    %1559 = vmatmul.mubr.bf16.gmra.mrb[0].mxu0 %v1395
    %v1560 = vpop.f32.mrb[0].mxu0
    %v1561 = vadd.f32 %v1404, %v1560
    %v1562 = vpop.f32.mrb[0].mxu0
    %v1563 = vpop.f32.mrb[0].mxu0
    %v1564 = vadd.f32 %v1404, %v1563
    %v1565 = vpop.f32.mrb[0].mxu0
    %1566 = vmatprep.mubr.bf16.mxu0 %v1283
    %1567 = vmatmul.mubr.bf16.gmra.mrb[0].mxu0 %v1396
    %v1568 = vpop.f32.mrb[0].mxu0
    %v1569 = vadd.f32 %v1404, %v1568
    %v1570 = vpop.f32.mrb[0].mxu0
    %v1571 = vpop.f32.mrb[0].mxu0
    %v1572 = vadd.f32 %v1404, %v1571
    %v1573 = vpop.f32.mrb[0].mxu0
    %1574 = vmatprep.mubr.bf16.mxu0 %v1284
    %1575 = vmatmul.mubr.bf16.gmra.mrb[0].mxu0 %v1397
    %v1576 = vpop.f32.mrb[0].mxu0
    %v1577 = vadd.f32 %v1404, %v1576
    %v1578 = vpop.f32.mrb[0].mxu0
    %v1579 = vpop.f32.mrb[0].mxu0
    %v1580 = vadd.f32 %v1404, %v1579
    %v1581 = vpop.f32.mrb[0].mxu0
    %1582 = vmatprep.mubr.bf16.mxu0 %v1285
    %1583 = vmatmul.mubr.bf16.gmra.mrb[0].mxu0 %v1398
    %v1584 = vpop.f32.mrb[0].mxu0
    %v1585 = vadd.f32 %v1404, %v1584
    %v1586 = vpop.f32.mrb[0].mxu0
    %v1587 = vpop.f32.mrb[0].mxu0
    %v1588 = vadd.f32 %v1404, %v1587
    %v1589 = vpop.f32.mrb[0].mxu0
    %1590 = vmatprep.mubr.bf16.mxu0 %v1286
    %1591 = vmatmul.mubr.bf16.gmra.mrb[0].mxu0 %v1399
    %v1592 = vpop.f32.mrb[0].mxu0
    %v1593 = vadd.f32 %v1404, %v1592
    %v1594 = vpop.f32.mrb[0].mxu0
    %v1595 = vpop.f32.mrb[0].mxu0
    %v1596 = vadd.f32 %v1404, %v1595
    %v1597 = vpop.f32.mrb[0].mxu0
    %1598 = vdwg.mxu0
    %v1599 = vpack.c.bf16 %v1540, %v1537
    %v1600 = vpack.c.bf16 %v1548, %v1545
    %v1601 = vpack.c.bf16 %v1556, %v1553
    %v1602 = vpack.c.bf16 %v1564, %v1561
    %v1603 = vpack.c.bf16 %v1572, %v1569
    %v1604 = vpack.c.bf16 %v1580, %v1577
    %v1605 = vpack.c.bf16 %v1588, %v1585
    %v1606 = vpack.c.bf16 %v1596, %v1593
    %1607 = vmatprep.subr.bf16.mxu0 0
    %1608 = vmatpush1.bf16.msra.mxu0 %v1279
    %1609 = vmatprep.subr.bf16.mxu0 0
    %1610 = vmatpush1.bf16.msra.mxu0 %v1280
    %1611 = vmatprep.subr.bf16.mxu0 0
    %1612 = vmatpush1.bf16.msra.mxu0 %v1281
    %1613 = vmatprep.subr.bf16.mxu0 0
    %1614 = vmatpush1.bf16.msra.mxu0 %v1282
    %1615 = vmatprep.subr.bf16.mxu0 0
    %1616 = vmatpush1.bf16.msra.mxu0 %v1283
    %1617 = vmatprep.subr.bf16.mxu0 0
    %1618 = vmatpush1.bf16.msra.mxu0 %v1284
    %1619 = vmatprep.subr.bf16.mxu0 0
    %1620 = vmatpush1.bf16.msra.mxu0 %v1285
    %1621 = vmatprep.subr.bf16.mxu0 0
    %1622 = vmatpush1.bf16.msra.mxu0 %v1286
    %1623 = vmatprep.subr.bf16.mxu0 0
    %1624 = vmatpush1.bf16.msra.mxu0 0
    %1625 = vmatprep.subr.bf16.mxu0 0
    %1626 = vmatpush1.bf16.msra.mxu0 0
    %1627 = vmatprep.subr.bf16.mxu0 0
    %1628 = vmatpush1.bf16.msra.mxu0 0
    %1629 = vmatprep.subr.bf16.mxu0 0
    %1630 = vmatpush1.bf16.msra.mxu0 0
    %1631 = vmatprep.subr.bf16.mxu0 0
    %1632 = vmatpush1.bf16.msra.mxu0 0
    %1633 = vmatprep.subr.bf16.mxu0 0
    %1634 = vmatpush1.bf16.msra.mxu0 0
    %1635 = vmatprep.subr.bf16.mxu0 0
    %1636 = vmatpush1.bf16.msra.mxu0 0
    %1637 = vmatprep.subr.bf16.mxu0 0
    %1638 = vmatpush1.bf16.msra.mxu0 0
    %1639 = vmatprep.mubr.bf16.mxu0 0
    %1640 = vmatmul.mubr.bf16.gmra.mrb[0].mxu0 %v943
    %v1641 = vpop.f32.mrb[0].mxu0
    %v1642 = vadd.f32 0.0, %v1641
    %v1643 = vpop.f32.mrb[0].mxu0
    %v1644 = vpop.f32.mrb[0].mxu0
    %v1645 = vadd.f32 0.0, %v1644
    %v1646 = vpop.f32.mrb[0].mxu0
    %1647 = vmatprep.mubr.bf16.mxu0 0
    %1648 = vmatmul.mubr.bf16.gmra.mrb[0].mxu0 %v944
    %v1649 = vpop.f32.mrb[0].mxu0
    %v1650 = vadd.f32 0.0, %v1649
    %v1651 = vpop.f32.mrb[0].mxu0
    %v1652 = vpop.f32.mrb[0].mxu0
    %v1653 = vadd.f32 0.0, %v1652
    %v1654 = vpop.f32.mrb[0].mxu0
    %1655 = vmatprep.mubr.bf16.mxu0 0
    %1656 = vmatmul.mubr.bf16.gmra.mrb[0].mxu0 %v945
    %v1657 = vpop.f32.mrb[0].mxu0
    %v1658 = vadd.f32 0.0, %v1657
    %v1659 = vpop.f32.mrb[0].mxu0
    %v1660 = vpop.f32.mrb[0].mxu0
    %v1661 = vadd.f32 0.0, %v1660
    %v1662 = vpop.f32.mrb[0].mxu0
    %1663 = vmatprep.mubr.bf16.mxu0 0
    %1664 = vmatmul.mubr.bf16.gmra.mrb[0].mxu0 %v946
    %v1665 = vpop.f32.mrb[0].mxu0
    %v1666 = vadd.f32 0.0, %v1665
    %v1667 = vpop.f32.mrb[0].mxu0
    %v1668 = vpop.f32.mrb[0].mxu0
    %v1669 = vadd.f32 0.0, %v1668
    %v1670 = vpop.f32.mrb[0].mxu0
    %1671 = vmatprep.mubr.bf16.mxu0 0
    %1672 = vmatmul.mubr.bf16.gmra.mrb[0].mxu0 %v947
    %v1673 = vpop.f32.mrb[0].mxu0
    %v1674 = vadd.f32 0.0, %v1673
    %v1675 = vpop.f32.mrb[0].mxu0
    %v1676 = vpop.f32.mrb[0].mxu0
    %v1677 = vadd.f32 0.0, %v1676
    %v1678 = vpop.f32.mrb[0].mxu0
    %1679 = vmatprep.mubr.bf16.mxu0 0
    %1680 = vmatmul.mubr.bf16.gmra.mrb[0].mxu0 %v948
    %v1681 = vpop.f32.mrb[0].mxu0
    %v1682 = vadd.f32 0.0, %v1681
    %v1683 = vpop.f32.mrb[0].mxu0
    %v1684 = vpop.f32.mrb[0].mxu0
    %v1685 = vadd.f32 0.0, %v1684
    %v1686 = vpop.f32.mrb[0].mxu0
    %1687 = vmatprep.mubr.bf16.mxu0 0
    %1688 = vmatmul.mubr.bf16.gmra.mrb[0].mxu0 %v949
    %v1689 = vpop.f32.mrb[0].mxu0
    %v1690 = vadd.f32 0.0, %v1689
    %v1691 = vpop.f32.mrb[0].mxu0
    %v1692 = vpop.f32.mrb[0].mxu0
    %v1693 = vadd.f32 0.0, %v1692
    %v1694 = vpop.f32.mrb[0].mxu0
    %1695 = vmatprep.mubr.bf16.mxu0 0
    %1696 = vmatmul.mubr.bf16.gmra.mrb[0].mxu0 %v950
    %v1697 = vpop.f32.mrb[0].mxu0
    %v1698 = vadd.f32 0.0, %v1697
    %v1699 = vpop.f32.mrb[0].mxu0
    %v1700 = vpop.f32.mrb[0].mxu0
    %v1701 = vadd.f32 0.0, %v1700
    %v1702 = vpop.f32.mrb[0].mxu0
    %1703 = vdwg.mxu0
    %v1704 = vpack.c.bf16 %v1645, %v1642
    %v1705 = vpack.c.bf16 %v1653, %v1650
    %v1706 = vpack.c.bf16 %v1661, %v1658
    %v1707 = vpack.c.bf16 %v1669, %v1666
    %v1708 = vpack.c.bf16 %v1677, %v1674
    %v1709 = vpack.c.bf16 %v1685, %v1682
    %v1710 = vpack.c.bf16 %v1693, %v1690
    %v1711 = vpack.c.bf16 %v1701, %v1698
    %v1713 = vlaneseq
    %v1714 = vshrl.u32 %v1713, 7
    %v1715 = vsub.s32 0, %v1714
    %v1716 = vrot.slane %v396, %v1715
    %v1750 = vunpack.c.l.b16 %v364
    %v1751 = vunpack.c.l.b16 %v365
    %v1752 = vunpack.c.l.b16 %v366
    %v1753 = vunpack.c.l.b16 %v367
    %v1754 = vunpack.c.l.b16 %v368
    %v1755 = vunpack.c.l.b16 %v369
    %v1756 = vunpack.c.l.b16 %v370
    %v1757 = vunpack.c.l.b16 %v371
    %v1758 = vunpack.c.l.b16 %v372
    %v1759 = vunpack.c.l.b16 %v373
    %v1760 = vunpack.c.l.b16 %v374
    %v1761 = vunpack.c.l.b16 %v375
    %v1762 = vunpack.c.l.b16 %v376
    %v1763 = vunpack.c.l.b16 %v377
    %v1764 = vunpack.c.l.b16 %v378
    %v1765 = vunpack.c.l.b16 %v379
    %v1766 = vunpack.c.l.b16 %v380
    %v1767 = vunpack.c.l.b16 %v381
    %v1768 = vunpack.c.l.b16 %v382
    %v1769 = vunpack.c.l.b16 %v383
    %v1770 = vunpack.c.l.b16 %v384
    %v1771 = vunpack.c.l.b16 %v385
    %v1772 = vunpack.c.l.b16 %v386
    %v1773 = vunpack.c.l.b16 %v387
    %v1774 = vunpack.c.l.b16 %v388
    %v1775 = vunpack.c.l.b16 %v389
    %v1776 = vunpack.c.l.b16 %v390
    %v1777 = vunpack.c.l.b16 %v391
    %v1778 = vunpack.c.l.b16 %v392
    %v1779 = vunpack.c.l.b16 %v393
    %v1780 = vunpack.c.l.b16 %v394
    %v1781 = vunpack.c.l.b16 %v395
    %v1782 = vpack.c.b16 %v1751, %v1750
    %v1783 = vpack.c.b16 %v1753, %v1752
    %v1784 = vpack.c.b16 %v1755, %v1754
    %v1785 = vpack.c.b16 %v1757, %v1756
    %v1786 = vpack.c.b16 %v1759, %v1758
    %v1787 = vpack.c.b16 %v1761, %v1760
    %v1788 = vpack.c.b16 %v1763, %v1762
    %v1789 = vpack.c.b16 %v1765, %v1764
    %v1790 = vpack.c.b16 %v1767, %v1766
    %v1791 = vpack.c.b16 %v1769, %v1768
    %v1792 = vpack.c.b16 %v1771, %v1770
    %v1793 = vpack.c.b16 %v1773, %v1772
    %v1794 = vpack.c.b16 %v1775, %v1774
    %v1795 = vpack.c.b16 %v1777, %v1776
    %v1796 = vpack.c.b16 %v1779, %v1778
    %v1797 = vpack.c.b16 %v1781, %v1780
    %1814 = vmatprep.subr.bf16.mxu0 0
    %1815 = vmatpush1.bf16.msra.mxu0 %v1782
    %1816 = vmatprep.subr.bf16.mxu0 0
    %1817 = vmatpush1.bf16.msra.mxu0 %v1783
    %1818 = vmatprep.subr.bf16.mxu0 0
    %1819 = vmatpush1.bf16.msra.mxu0 %v1784
    %1820 = vmatprep.subr.bf16.mxu0 0
    %1821 = vmatpush1.bf16.msra.mxu0 %v1785
    %1822 = vmatprep.subr.bf16.mxu0 0
    %1823 = vmatpush1.bf16.msra.mxu0 %v1786
    %1824 = vmatprep.subr.bf16.mxu0 0
    %1825 = vmatpush1.bf16.msra.mxu0 %v1787
    %1826 = vmatprep.subr.bf16.mxu0 0
    %1827 = vmatpush1.bf16.msra.mxu0 %v1788
    %1828 = vmatprep.subr.bf16.mxu0 0
    %1829 = vmatpush1.bf16.msra.mxu0 %v1789
    %1830 = vmatprep.subr.bf16.mxu0 0
    %1831 = vmatpush1.bf16.msra.mxu0 %v1790
    %1832 = vmatprep.subr.bf16.mxu0 0
    %1833 = vmatpush1.bf16.msra.mxu0 %v1791
    %1834 = vmatprep.subr.bf16.mxu0 0
    %1835 = vmatpush1.bf16.msra.mxu0 %v1792
    %1836 = vmatprep.subr.bf16.mxu0 0
    %1837 = vmatpush1.bf16.msra.mxu0 %v1793
    %1838 = vmatprep.subr.bf16.mxu0 0
    %1839 = vmatpush1.bf16.msra.mxu0 %v1794
    %1840 = vmatprep.subr.bf16.mxu0 0
    %1841 = vmatpush1.bf16.msra.mxu0 %v1795
    %1842 = vmatprep.subr.bf16.mxu0 0
    %1843 = vmatpush1.bf16.msra.mxu0 %v1796
    %1844 = vmatprep.subr.bf16.mxu0 0
    %1845 = vmatpush1.bf16.msra.mxu0 %v1797
    %1846 = vmatprep.mubr.bf16.mxu0 %v1287
    %1847 = vmatmul.mubr.bf16.gmra.mrb[0].mxu0 %v1704
    %v1848 = vpop.f32.mrb[0].mxu0
    %v1849 = vadd.f32 %v1716, %v1848
    %v1850 = vpop.f32.mrb[0].mxu0
    %v1851 = vpop.f32.mrb[0].mxu0
    %v1852 = vadd.f32 %v1716, %v1851
    %v1853 = vpop.f32.mrb[0].mxu0
    %1854 = vmatprep.mubr.bf16.mxu0 %v1288
    %1855 = vmatmul.mubr.bf16.gmra.mrb[0].mxu0 %v1705
    %v1856 = vpop.f32.mrb[0].mxu0
    %v1857 = vadd.f32 %v1716, %v1856
    %v1858 = vpop.f32.mrb[0].mxu0
    %v1859 = vpop.f32.mrb[0].mxu0
    %v1860 = vadd.f32 %v1716, %v1859
    %v1861 = vpop.f32.mrb[0].mxu0
    %1862 = vmatprep.mubr.bf16.mxu0 %v1289
    %1863 = vmatmul.mubr.bf16.gmra.mrb[0].mxu0 %v1706
    %v1864 = vpop.f32.mrb[0].mxu0
    %v1865 = vadd.f32 %v1716, %v1864
    %v1866 = vpop.f32.mrb[0].mxu0
    %v1867 = vpop.f32.mrb[0].mxu0
    %v1868 = vadd.f32 %v1716, %v1867
    %v1869 = vpop.f32.mrb[0].mxu0
    %1870 = vmatprep.mubr.bf16.mxu0 %v1290
    %1871 = vmatmul.mubr.bf16.gmra.mrb[0].mxu0 %v1707
    %v1872 = vpop.f32.mrb[0].mxu0
    %v1873 = vadd.f32 %v1716, %v1872
    %v1874 = vpop.f32.mrb[0].mxu0
    %v1875 = vpop.f32.mrb[0].mxu0
    %v1876 = vadd.f32 %v1716, %v1875
    %v1877 = vpop.f32.mrb[0].mxu0
    %1878 = vmatprep.mubr.bf16.mxu0 %v1291
    %1879 = vmatmul.mubr.bf16.gmra.mrb[0].mxu0 %v1708
    %v1880 = vpop.f32.mrb[0].mxu0
    %v1881 = vadd.f32 %v1716, %v1880
    %v1882 = vpop.f32.mrb[0].mxu0
    %v1883 = vpop.f32.mrb[0].mxu0
    %v1884 = vadd.f32 %v1716, %v1883
    %v1885 = vpop.f32.mrb[0].mxu0
    %1886 = vmatprep.mubr.bf16.mxu0 %v1292
    %1887 = vmatmul.mubr.bf16.gmra.mrb[0].mxu0 %v1709
    %v1888 = vpop.f32.mrb[0].mxu0
    %v1889 = vadd.f32 %v1716, %v1888
    %v1890 = vpop.f32.mrb[0].mxu0
    %v1891 = vpop.f32.mrb[0].mxu0
    %v1892 = vadd.f32 %v1716, %v1891
    %v1893 = vpop.f32.mrb[0].mxu0
    %1894 = vmatprep.mubr.bf16.mxu0 %v1293
    %1895 = vmatmul.mubr.bf16.gmra.mrb[0].mxu0 %v1710
    %v1896 = vpop.f32.mrb[0].mxu0
    %v1897 = vadd.f32 %v1716, %v1896
    %v1898 = vpop.f32.mrb[0].mxu0
    %v1899 = vpop.f32.mrb[0].mxu0
    %v1900 = vadd.f32 %v1716, %v1899
    %v1901 = vpop.f32.mrb[0].mxu0
    %1902 = vmatprep.mubr.bf16.mxu0 %v1294
    %1903 = vmatmul.mubr.bf16.gmra.mrb[0].mxu0 %v1711
    %v1904 = vpop.f32.mrb[0].mxu0
    %v1905 = vadd.f32 %v1716, %v1904
    %v1906 = vpop.f32.mrb[0].mxu0
    %v1907 = vpop.f32.mrb[0].mxu0
    %v1908 = vadd.f32 %v1716, %v1907
    %v1909 = vpop.f32.mrb[0].mxu0
    %1910 = vdwg.mxu0
    %v1911 = vpack.c.bf16 %v1852, %v1849
    %v1912 = vpack.c.bf16 %v1860, %v1857
    %v1913 = vpack.c.bf16 %v1868, %v1865
    %v1914 = vpack.c.bf16 %v1876, %v1873
    %v1915 = vpack.c.bf16 %v1884, %v1881
    %v1916 = vpack.c.bf16 %v1892, %v1889
    %v1917 = vpack.c.bf16 %v1900, %v1897
    %v1918 = vpack.c.bf16 %v1908, %v1905
    %v1921 = vunpack.c.l.b16 %v261
    %v1922 = vunpack.c.l.b16 %v262
    %v1923 = vpack.c.b16 %v1922, %v1921
    %1925 = vmatprep.subr.bf16.mxu0 0
    %1926 = vmatpush1.bf16.msra.mxu0 %v1911
    %1927 = vmatprep.subr.bf16.mxu0 0
    %1928 = vmatpush1.bf16.msra.mxu0 %v1912
    %1929 = vmatprep.subr.bf16.mxu0 0
    %1930 = vmatpush1.bf16.msra.mxu0 %v1913
    %1931 = vmatprep.subr.bf16.mxu0 0
    %1932 = vmatpush1.bf16.msra.mxu0 %v1914
    %1933 = vmatprep.subr.bf16.mxu0 0
    %1934 = vmatpush1.bf16.msra.mxu0 %v1915
    %1935 = vmatprep.subr.bf16.mxu0 0
    %1936 = vmatpush1.bf16.msra.mxu0 %v1916
    %1937 = vmatprep.subr.bf16.mxu0 0
    %1938 = vmatpush1.bf16.msra.mxu0 %v1917
    %1939 = vmatprep.subr.bf16.mxu0 0
    %1940 = vmatpush1.bf16.msra.mxu0 %v1918
    %1941 = vmatprep.subr.bf16.mxu0 0
    %1942 = vmatpush1.bf16.msra.mxu0 0
    %1943 = vmatprep.subr.bf16.mxu0 0
    %1944 = vmatpush1.bf16.msra.mxu0 0
    %1945 = vmatprep.subr.bf16.mxu0 0
    %1946 = vmatpush1.bf16.msra.mxu0 0
    %1947 = vmatprep.subr.bf16.mxu0 0
    %1948 = vmatpush1.bf16.msra.mxu0 0
    %1949 = vmatprep.subr.bf16.mxu0 0
    %1950 = vmatpush1.bf16.msra.mxu0 0
    %1951 = vmatprep.subr.bf16.mxu0 0
    %1952 = vmatpush1.bf16.msra.mxu0 0
    %1953 = vmatprep.subr.bf16.mxu0 0
    %1954 = vmatpush1.bf16.msra.mxu0 0
    %1955 = vmatprep.subr.bf16.mxu0 0
    %1956 = vmatpush1.bf16.msra.mxu0 0
    %1957 = vmatprep.mubr.bf16.mxu0 0
    %1958 = vmatmul.mubr.bf16.gmra.mrb[0].mxu0 %v1923
    %v1959 = vpop.f32.mrb[0].mxu0
    %v1960 = vadd.f32 0.0, %v1959
    %v1961 = vpop.f32.mrb[0].mxu0
    %v1962 = vpop.f32.mrb[0].mxu0
    %v1963 = vadd.f32 0.0, %v1962
    %v1964 = vpop.f32.mrb[0].mxu0
    %1965 = vdwg.mxu0
    %v1968 = vunpack.c.l.b16 %v263
    %v1969 = vunpack.c.l.b16 %v264
    %v1970 = vpack.c.b16 %v1969, %v1968
    %1972 = vmatprep.subr.bf16.mxu0 0
    %1973 = vmatpush1.bf16.msra.mxu0 %v1599
    %1974 = vmatprep.subr.bf16.mxu0 0
    %1975 = vmatpush1.bf16.msra.mxu0 %v1600
    %1976 = vmatprep.subr.bf16.mxu0 0
    %1977 = vmatpush1.bf16.msra.mxu0 %v1601
    %1978 = vmatprep.subr.bf16.mxu0 0
    %1979 = vmatpush1.bf16.msra.mxu0 %v1602
    %1980 = vmatprep.subr.bf16.mxu0 0
    %1981 = vmatpush1.bf16.msra.mxu0 %v1603
    %1982 = vmatprep.subr.bf16.mxu0 0
    %1983 = vmatpush1.bf16.msra.mxu0 %v1604
    %1984 = vmatprep.subr.bf16.mxu0 0
    %1985 = vmatpush1.bf16.msra.mxu0 %v1605
    %1986 = vmatprep.subr.bf16.mxu0 0
    %1987 = vmatpush1.bf16.msra.mxu0 %v1606
    %1988 = vmatprep.subr.bf16.mxu0 0
    %1989 = vmatpush1.bf16.msra.mxu0 0
    %1990 = vmatprep.subr.bf16.mxu0 0
    %1991 = vmatpush1.bf16.msra.mxu0 0
    %1992 = vmatprep.subr.bf16.mxu0 0
    %1993 = vmatpush1.bf16.msra.mxu0 0
    %1994 = vmatprep.subr.bf16.mxu0 0
    %1995 = vmatpush1.bf16.msra.mxu0 0
    %1996 = vmatprep.subr.bf16.mxu0 0
    %1997 = vmatpush1.bf16.msra.mxu0 0
    %1998 = vmatprep.subr.bf16.mxu0 0
    %1999 = vmatpush1.bf16.msra.mxu0 0
    %2000 = vmatprep.subr.bf16.mxu0 0
    %2001 = vmatpush1.bf16.msra.mxu0 0
    %2002 = vmatprep.subr.bf16.mxu0 0
    %2003 = vmatpush1.bf16.msra.mxu0 0
    %2004 = vmatprep.mubr.bf16.mxu0 0
    %2005 = vmatmul.mubr.bf16.gmra.mrb[0].mxu0 %v1970
    %v2006 = vpop.f32.mrb[0].mxu0
    %v2007 = vadd.f32 0.0, %v2006
    %v2008 = vpop.f32.mrb[0].mxu0
    %v2009 = vpop.f32.mrb[0].mxu0
    %v2010 = vadd.f32 0.0, %v2009
    %v2011 = vpop.f32.mrb[0].mxu0
    %2012 = vdwg.mxu0
    %v2013 = vpack.c.bf16 %v1963, %v1960
    %v2014 = vpack.c.bf16 %v2010, %v2007
    %v2016 = vlaneseq
    %v2017 = vshrl.u32 %v2016, 7
    %v2018 = vsub.s32 0, %v2017
    %v2019 = vrot.slane %v429, %v2018
    %v2053 = vunpack.c.l.b16 %v397
    %v2054 = vunpack.c.l.b16 %v398
    %v2055 = vunpack.c.l.b16 %v399
    %v2056 = vunpack.c.l.b16 %v400
    %v2057 = vunpack.c.l.b16 %v401
    %v2058 = vunpack.c.l.b16 %v402
    %v2059 = vunpack.c.l.b16 %v403
    %v2060 = vunpack.c.l.b16 %v404
    %v2061 = vunpack.c.l.b16 %v405
    %v2062 = vunpack.c.l.b16 %v406
    %v2063 = vunpack.c.l.b16 %v407
    %v2064 = vunpack.c.l.b16 %v408
    %v2065 = vunpack.c.l.b16 %v409
    %v2066 = vunpack.c.l.b16 %v410
    %v2067 = vunpack.c.l.b16 %v411
    %v2068 = vunpack.c.l.b16 %v412
    %v2069 = vunpack.c.l.b16 %v413
    %v2070 = vunpack.c.l.b16 %v414
    %v2071 = vunpack.c.l.b16 %v415
    %v2072 = vunpack.c.l.b16 %v416
    %v2073 = vunpack.c.l.b16 %v417
    %v2074 = vunpack.c.l.b16 %v418
    %v2075 = vunpack.c.l.b16 %v419
    %v2076 = vunpack.c.l.b16 %v420
    %v2077 = vunpack.c.l.b16 %v421
    %v2078 = vunpack.c.l.b16 %v422
    %v2079 = vunpack.c.l.b16 %v423
    %v2080 = vunpack.c.l.b16 %v424
    %v2081 = vunpack.c.l.b16 %v425
    %v2082 = vunpack.c.l.b16 %v426
    %v2083 = vunpack.c.l.b16 %v427
    %v2084 = vunpack.c.l.b16 %v428
    %v2085 = vpack.c.b16 %v2054, %v2053
    %v2086 = vpack.c.b16 %v2056, %v2055
    %v2087 = vpack.c.b16 %v2058, %v2057
    %v2088 = vpack.c.b16 %v2060, %v2059
    %v2089 = vpack.c.b16 %v2062, %v2061
    %v2090 = vpack.c.b16 %v2064, %v2063
    %v2091 = vpack.c.b16 %v2066, %v2065
    %v2092 = vpack.c.b16 %v2068, %v2067
    %v2093 = vpack.c.b16 %v2070, %v2069
    %v2094 = vpack.c.b16 %v2072, %v2071
    %v2095 = vpack.c.b16 %v2074, %v2073
    %v2096 = vpack.c.b16 %v2076, %v2075
    %v2097 = vpack.c.b16 %v2078, %v2077
    %v2098 = vpack.c.b16 %v2080, %v2079
    %v2099 = vpack.c.b16 %v2082, %v2081
    %v2100 = vpack.c.b16 %v2084, %v2083
    %2117 = vmatprep.subr.bf16.mxu0 0
    %2118 = vmatpush1.bf16.msra.mxu0 %v2085
    %2119 = vmatprep.subr.bf16.mxu0 0
    %2120 = vmatpush1.bf16.msra.mxu0 %v2086
    %2121 = vmatprep.subr.bf16.mxu0 0
    %2122 = vmatpush1.bf16.msra.mxu0 %v2087
    %2123 = vmatprep.subr.bf16.mxu0 0
    %2124 = vmatpush1.bf16.msra.mxu0 %v2088
    %2125 = vmatprep.subr.bf16.mxu0 0
    %2126 = vmatpush1.bf16.msra.mxu0 %v2089
    %2127 = vmatprep.subr.bf16.mxu0 0
    %2128 = vmatpush1.bf16.msra.mxu0 %v2090
    %2129 = vmatprep.subr.bf16.mxu0 0
    %2130 = vmatpush1.bf16.msra.mxu0 %v2091
    %2131 = vmatprep.subr.bf16.mxu0 0
    %2132 = vmatpush1.bf16.msra.mxu0 %v2092
    %2133 = vmatprep.subr.bf16.mxu0 0
    %2134 = vmatpush1.bf16.msra.mxu0 %v2093
    %2135 = vmatprep.subr.bf16.mxu0 0
    %2136 = vmatpush1.bf16.msra.mxu0 %v2094
    %2137 = vmatprep.subr.bf16.mxu0 0
    %2138 = vmatpush1.bf16.msra.mxu0 %v2095
    %2139 = vmatprep.subr.bf16.mxu0 0
    %2140 = vmatpush1.bf16.msra.mxu0 %v2096
    %2141 = vmatprep.subr.bf16.mxu0 0
    %2142 = vmatpush1.bf16.msra.mxu0 %v2097
    %2143 = vmatprep.subr.bf16.mxu0 0
    %2144 = vmatpush1.bf16.msra.mxu0 %v2098
    %2145 = vmatprep.subr.bf16.mxu0 0
    %2146 = vmatpush1.bf16.msra.mxu0 %v2099
    %2147 = vmatprep.subr.bf16.mxu0 0
    %2148 = vmatpush1.bf16.msra.mxu0 %v2100
    %2149 = vmatprep.mubr.bf16.mxu0 %v2014
    %2150 = vmatmul.mubr.bf16.gmra.mrb[0].mxu0 %v2013
    %v2151 = vpop.f32.mrb[0].mxu0
    %v2152 = vadd.f32 %v2019, %v2151
    %v2153 = vpop.f32.mrb[0].mxu0
    %v2154 = vpop.f32.mrb[0].mxu0
    %v2155 = vadd.f32 %v2019, %v2154
    %v2156 = vpop.f32.mrb[0].mxu0
    %2157 = vdwg.mxu0
    %v2158 = vxor.u32 %v2152, 2147483648
    %v2159 = vxor.u32 %v2155, 2147483648
    %v2160 = vmul.f32 %v2158, 1.442695
    %v2161 = vpow.pop %v2160
    %v2162 = vmul.f32 %v2159, 1.442695
    %v2163 = vpow.pop %v2162
    %v2164 = vadd.f32 %v2161, 1.0
    %v2165 = vadd.f32 %v2163, 1.0
    %v2166 = vrcp.pop %v2164
    %v2167 = vmul.f32 1.0, %v2166
    %v2168 = vrcp.pop %v2165
    %v2169 = vmul.f32 1.0, %v2168
    %v2170 = vpack.c.bf16 %v2169, %v2167
    %v2172 = vlaneseq
    %v2173 = vshrl.u32 %v2172, 7
    %v2174 = vsub.s32 0, %v2173
    %v2175 = vrot.slane %v446, %v2174
    %v2193 = vunpack.c.l.b16 %v430
    %v2194 = vunpack.c.l.b16 %v431
    %v2195 = vunpack.c.l.b16 %v432
    %v2196 = vunpack.c.l.b16 %v433
    %v2197 = vunpack.c.l.b16 %v434
    %v2198 = vunpack.c.l.b16 %v435
    %v2199 = vunpack.c.l.b16 %v436
    %v2200 = vunpack.c.l.b16 %v437
    %v2201 = vunpack.c.l.b16 %v438
    %v2202 = vunpack.c.l.b16 %v439
    %v2203 = vunpack.c.l.b16 %v440
    %v2204 = vunpack.c.l.b16 %v441
    %v2205 = vunpack.c.l.b16 %v442
    %v2206 = vunpack.c.l.b16 %v443
    %v2207 = vunpack.c.l.b16 %v444
    %v2208 = vunpack.c.l.b16 %v445
    %v2209 = vpack.c.b16 %v2194, %v2193
    %v2210 = vpack.c.b16 %v2196, %v2195
    %v2211 = vpack.c.b16 %v2198, %v2197
    %v2212 = vpack.c.b16 %v2200, %v2199
    %v2213 = vpack.c.b16 %v2202, %v2201
    %v2214 = vpack.c.b16 %v2204, %v2203
    %v2215 = vpack.c.b16 %v2206, %v2205
    %v2216 = vpack.c.b16 %v2208, %v2207
    %2225 = vmatprep.subr.bf16.mxu0 0
    %2226 = vmatpush1.bf16.msra.mxu0 %v2209
    %2227 = vmatprep.subr.bf16.mxu0 0
    %2228 = vmatpush1.bf16.msra.mxu0 %v2210
    %2229 = vmatprep.subr.bf16.mxu0 0
    %2230 = vmatpush1.bf16.msra.mxu0 %v2211
    %2231 = vmatprep.subr.bf16.mxu0 0
    %2232 = vmatpush1.bf16.msra.mxu0 %v2212
    %2233 = vmatprep.subr.bf16.mxu0 0
    %2234 = vmatpush1.bf16.msra.mxu0 %v2213
    %2235 = vmatprep.subr.bf16.mxu0 0
    %2236 = vmatpush1.bf16.msra.mxu0 %v2214
    %2237 = vmatprep.subr.bf16.mxu0 0
    %2238 = vmatpush1.bf16.msra.mxu0 %v2215
    %2239 = vmatprep.subr.bf16.mxu0 0
    %2240 = vmatpush1.bf16.msra.mxu0 %v2216
    %2241 = vmatprep.subr.bf16.mxu0 0
    %2242 = vmatpush1.bf16.msra.mxu0 0
    %2243 = vmatprep.subr.bf16.mxu0 0
    %2244 = vmatpush1.bf16.msra.mxu0 0
    %2245 = vmatprep.subr.bf16.mxu0 0
    %2246 = vmatpush1.bf16.msra.mxu0 0
    %2247 = vmatprep.subr.bf16.mxu0 0
    %2248 = vmatpush1.bf16.msra.mxu0 0
    %2249 = vmatprep.subr.bf16.mxu0 0
    %2250 = vmatpush1.bf16.msra.mxu0 0
    %2251 = vmatprep.subr.bf16.mxu0 0
    %2252 = vmatpush1.bf16.msra.mxu0 0
    %2253 = vmatprep.subr.bf16.mxu0 0
    %2254 = vmatpush1.bf16.msra.mxu0 0
    %2255 = vmatprep.subr.bf16.mxu0 0
    %2256 = vmatpush1.bf16.msra.mxu0 0
    %2257 = vmatprep.mubr.bf16.mxu0 0
    %2258 = vmatmul.mubr.bf16.gmra.mrb[0].mxu0 %v2170
    %v2259 = vpop.f32.mrb[0].mxu0
    %v2260 = vadd.f32 %v2175, %v2259
    %v2261 = vpop.f32.mrb[0].mxu0
    %v2262 = vpop.f32.mrb[0].mxu0
    %v2263 = vadd.f32 %v2175, %v2262
    %v2264 = vpop.f32.mrb[0].mxu0
    %2265 = vdwg.mxu0
    %2266 = vst [vmem:[#allocation19] sm:$0xff] %v2260
    %2267 = vst [vmem:[#allocation19 + $0x8] sm:$0xff] %v2263
    // Predicated region
    $region114: #{tpu_custom_call.1} parent=1 // pred_check
      _
    $region115: #{tpu_custom_call.1} parent=1 // pred_check_branch
      %2269 = sbr.rel (0) target = $region117
    $region116: #{tpu_custom_call.1} parent=1 // pred_region
      %s2271 = ssub.s32 256, 256
      %2272 = vsyncadd [#allocation4], %s2271
      %s2273 = sshll.u32 [#allocation19], 4
      %s2274 = int_to_ptr.vmem [resolvable:$true] %s2273
      %2279 = dma.vmem_to_hbm [thread:$0]  %s2274, 256, %s18, [#allocation4], 128, 128, 8
    $region117: #{tpu_custom_call.1} parent=1 // pred_fallthru
      _
    // Predicated region
    $region118: #{tpu_custom_call.1} parent=1 // pred_check
      _
    $region119: #{tpu_custom_call.1} parent=1 // pred_check_branch
      %2281 = sbr.rel (0) target = $region121
    $region120: #{tpu_custom_call.1} parent=1 // pred_region
      %2282 = dma.done [#allocation4], 256
    $region121: #{tpu_custom_call.1} parent=1 // pred_fallthru
      _
    %2283 = vsyncpa [#allocation3], 1
    %2284 = vsyncpa [#allocation6], 1
    %2285 = vsyncpa [#allocation9], 1
    %2286 = vsyncpa [#allocation12], 1
    %2287 = vsyncpa [#allocation15], 1
    %2288 = vsyncpa [#allocation18], 1
    %2289 = vsyncpa [#allocation4], 1

</llo_original>
